<compile_context>
chip_gen: v5e
topology: v5e:2x2
jax: 0.10.0
libtpu: 0.0.40
codegen_flags: <defaults>
</compile_context>

<pallas_src>
import jax
import jax.numpy as jnp
from jax.experimental import pallas as pl
from jax.experimental.pallas import tpu as pltpu

OUT_PAD = 128   # lane-dense padded width of the final projection (true width = 3)
HID1 = 1024
HID2 = 2048


def _mlp_kernel(x_ref, w1_ref, b1_ref, w2_ref, b2_ref, w3_ref, b3_ref, o_ref,
                h1_ref, acc_ref):
    """One (batch-tile i, hidden-chunk j) grid step.

    h1 (layer-1 activations, bf16) and the (TM, 128) f32 layer-3 accumulator live in
    VMEM scratch and persist across the j (chunk) axis for a fixed batch tile i.
    NOTE: padded batch rows hold relu(bias) junk; they are sliced off by the wrapper and
    there is NO reduction across the batch axis, so they are harmless — keep it that way.
    """
    j = pl.program_id(1)

    @pl.when(j == 0)
    def _():
        # Layer 1 is computed once per batch tile; kept bf16 for layer 2's MXU feed.
        x = x_ref[...].astype(jnp.bfloat16)
        h1 = jnp.dot(x, w1_ref[...], preferred_element_type=jnp.float32) + b1_ref[...]
        h1_ref[...] = jnp.maximum(h1, 0.0).astype(jnp.bfloat16)
        # Initialize the layer-3 accumulator with its (padded) bias.
        acc_ref[...] = jnp.broadcast_to(b3_ref[...], acc_ref.shape)

    # Layers 2 + 3 over one chunk of the 2048-wide hidden dim; f32 accumulation.
    h2 = jnp.dot(h1_ref[...], w2_ref[...], preferred_element_type=jnp.float32) + b2_ref[...]
    h2 = jnp.maximum(h2, 0.0).astype(jnp.bfloat16)
    acc_ref[...] += jnp.dot(h2, w3_ref[...], preferred_element_type=jnp.float32)

    @pl.when(j == pl.num_programs(1) - 1)
    def _():
        o_ref[...] = acc_ref[...].astype(o_ref.dtype)


def _pick_tiling(batch):
    """Choose batch tile TM and hidden-dim chunk count."""
    if batch <= 128:
        tm = max(8, 8 * ((batch + 7) // 8))   # single tile; don't pad tiny batches to 128
    elif batch <= 256:
        tm = 128                               # two tiles -> both v7x TensorCores busy
    else:
        tm = 256                               # fills the 256-wide MXU on v6e/v7x
    n_tiles = (batch + tm - 1) // tm
    # Single-tile (latency) regime: chunk hidden dim so weight DMA overlaps compute.
    # Multi-tile regime: whole, VMEM-resident weights (fetched once, reused every tile).
    n_chunks = 4 if n_tiles == 1 else 1
    return tm, n_tiles, n_chunks


def _vmem_limit_bytes():
    """Generation-aware scoped-VMEM cap (v7x only has 64 MiB physical VMEM)."""
    try:
        kind = jax.devices()[0].device_kind.lower()
    except Exception:
        kind = ""
    if "v5" in kind or "v6" in kind:
        return 64 * 1024 * 1024
    return 32 * 1024 * 1024   # safe default for v7x and unrecognized parts


def simple_model_forward(x, packed_params):
    """x: [B, 10] float32 -> [B, 3] float32. packed_params from pack_params()."""
    w1, b1, w2, b2, w3p, b3p = packed_params
    B, F = x.shape
    tm, n_tiles, n_chunks = _pick_tiling(B)
    b_pad = n_tiles * tm
    if b_pad != B:
        x = jnp.pad(x, ((0, b_pad - B), (0, 0)))
    chunk = HID2 // n_chunks

    out_padded = pl.pallas_call(
        _mlp_kernel,
        out_shape=jax.ShapeDtypeStruct((b_pad, OUT_PAD), jnp.float32),
        grid=(n_tiles, n_chunks),
        in_specs=[
            pl.BlockSpec((tm, F), lambda i, j: (i, 0)),           # x: tiled over batch
            pl.BlockSpec((F, HID1), lambda i, j: (0, 0)),         # w1: resident (~20 KiB)
            pl.BlockSpec((1, HID1), lambda i, j: (0, 0)),         # b1: resident
            pl.BlockSpec((HID1, chunk), lambda i, j: (0, j)),     # w2: chunked over hidden
            pl.BlockSpec((1, chunk), lambda i, j: (0, j)),        # b2: chunked
            pl.BlockSpec((chunk, OUT_PAD), lambda i, j: (j, 0)),  # w3: chunked over hidden
            pl.BlockSpec((1, OUT_PAD), lambda i, j: (0, 0)),      # b3: resident
        ],
        out_specs=pl.BlockSpec((tm, OUT_PAD), lambda i, j: (i, 0)),
        scratch_shapes=[
            pltpu.VMEM((tm, HID1), jnp.bfloat16),    # layer-1 activations per batch tile
            pltpu.VMEM((tm, OUT_PAD), jnp.float32),  # layer-3 accumulator
        ],
        compiler_params=pltpu.CompilerParams(
            dimension_semantics=("parallel", "arbitrary"),  # batch parallel, chunk reduce
            vmem_limit_bytes=_vmem_limit_bytes(),
        ),
    )(x, w1, b1, w2, b2, w3p, b3p)

    return out_padded[:B, :3]


def init_params(key):
    """Deterministic init mimicking nn.Linear (uniform +/- 1/sqrt(fan_in)).
    Weights created directly as [in, out] (= PyTorch weight.T)."""
    def linear(k, fan_in, fan_out):
        kw, kb = jax.random.split(k)
        bound = 1.0 / jnp.sqrt(fan_in)
        w = jax.random.uniform(kw, (fan_in, fan_out), jnp.float32, -bound, bound)
        b = jax.random.uniform(kb, (1, fan_out), jnp.float32, -bound, bound)
        return w, b

    k1, k2, k3 = jax.random.split(key, 3)
    w1, b1 = linear(k1, 10, HID1)
    w2, b2 = linear(k2, HID1, HID2)
    w3, b3 = linear(k3, HID2, 3)
    return (w1, b1, w2, b2, w3, b3)


def pack_params(params):
    """Cast weights to bf16 (halves HBM traffic) and pad the final projection to a
    lane-dense 128-column output. Biases stay f32 (added to the f32 accumulator)."""
    # TODO(synk): on v7x, w2/w3 could be stored as fp8-e4m3 with per-column scales to
    # further shrink the dominant weight fetch; kept bf16 here for portability.
    w1, b1, w2, b2, w3, b3 = params
    w3p = jnp.zeros((w3.shape[0], OUT_PAD), jnp.float32).at[:, : w3.shape[1]].set(w3)
    b3p = jnp.zeros((1, OUT_PAD), jnp.float32).at[:, : b3.shape[1]].set(b3)
    return (
        w1.astype(jnp.bfloat16), b1,
        w2.astype(jnp.bfloat16), b2,
        w3p.astype(jnp.bfloat16), b3p,
    )


def ref_forward_packed(x, packed_params):
    """Pure-JAX reference using the same bf16 weights / f32 accumulation."""
    w1, b1, w2, b2, w3p, b3p = packed_params
    h = jnp.dot(x.astype(jnp.bfloat16), w1, preferred_element_type=jnp.float32) + b1
    h = jnp.maximum(h, 0.0)
    h = jnp.dot(h.astype(jnp.bfloat16), w2, preferred_element_type=jnp.float32) + b2
    h = jnp.maximum(h, 0.0)
    out = jnp.dot(h.astype(jnp.bfloat16), w3p, preferred_element_type=jnp.float32) + b3p
    return out[:, :3]


def ref_forward_f32(x, params):
    """Pure-f32 reference matching the PyTorch module's arithmetic."""
    w1, b1, w2, b2, w3, b3 = params
    h = jnp.maximum(x @ w1 + b1, 0.0)
    h = jnp.maximum(h @ w2 + b2, 0.0)
    return h @ w3 + b3


if __name__ == "__main__":
    key = jax.random.PRNGKey(0)
    pkey, xkey = jax.random.split(key)
    params = init_params(pkey)
    packed = pack_params(params)

    # B=8   -> single-tile latency path (tm=8, hidden-dim chunking, no batch padding)
    # B=200 -> two tiles of tm=128 (dual-TC branch) with padded batch rows
    # B=300 -> tm=256, two tiles, padded rows, resident (unchunked) weights
    for B in (8, 200, 300):
        xk = jax.random.fold_in(xkey, B)
        x = jax.random.normal(xk, (B, 10), jnp.float32)

        out = simple_model_forward(x, packed)
        jax.block_until_ready(out)
        assert out.shape == (B, 3)

        ref_bf16 = ref_forward_packed(x, packed)
        assert jnp.allclose(out, ref_bf16, atol=2e-3, rtol=2e-3), (
            f"B={B}: vs bf16 ref max abs diff = {jnp.max(jnp.abs(out - ref_bf16))}")

        ref_f32 = ref_forward_f32(x, params)
        assert jnp.allclose(out, ref_f32, atol=5e-2, rtol=5e-2), (
            f"B={B}: vs f32 ref max abs diff = {jnp.max(jnp.abs(out - ref_f32))}")

    print("KERNEL_OK")
</pallas_src>

<mosaic_0001>
module attributes {stable_mosaic.version = 11 : i64} {
  func.func @_mlp_kernel(%arg0: i32, %arg1: i32, %arg2: memref<8x10xf32, #tpu.memory_space<vmem>>, %arg3: memref<10x1024xbf16, #tpu.memory_space<vmem>>, %arg4: memref<1x1024xf32, #tpu.memory_space<vmem>>, %arg5: memref<1024x512xbf16, #tpu.memory_space<vmem>>, %arg6: memref<1x512xf32, #tpu.memory_space<vmem>>, %arg7: memref<512x128xbf16, #tpu.memory_space<vmem>>, %arg8: memref<1x128xf32, #tpu.memory_space<vmem>>, %arg9: memref<8x128xf32, #tpu.memory_space<vmem>>, %arg10: memref<8x1024xbf16, #tpu.memory_space<vmem>>, %arg11: memref<8x128xf32, #tpu.memory_space<vmem>>) attributes {dimension_semantics = [#tpu.dimension_semantics<parallel>, #tpu.dimension_semantics<arbitrary>], iteration_bounds = array<i64: 1, 4>, scalar_prefetch = 0 : i64, scratch_operands = 2 : i64, tpu.core_type = #tpu.core_type<tc>, window_params = [{transform_indices = @transform_0, window_bounds = array<i64: 8, 10>}, {pipeline_mode = #tpu.pipeline_mode<synchronous>, transform_indices = @transform_1, window_bounds = array<i64: 10, 1024>}, {pipeline_mode = #tpu.pipeline_mode<synchronous>, transform_indices = @transform_2, window_bounds = array<i64: 1, 1024>}, {transform_indices = @transform_3, window_bounds = array<i64: 1024, 512>}, {transform_indices = @transform_4, window_bounds = array<i64: 1, 512>}, {transform_indices = @transform_5, window_bounds = array<i64: 512, 128>}, {pipeline_mode = #tpu.pipeline_mode<synchronous>, transform_indices = @transform_6, window_bounds = array<i64: 1, 128>}, {transform_indices = @transform_7, window_bounds = array<i64: 8, 128>}]} {
    %c0_i32 = arith.constant 0 : i32
    %0 = arith.cmpi eq, %arg1, %c0_i32 : i32
    %1 = arith.extui %0 : i1 to i32
    %c0_i32_0 = arith.constant 0 : i32
    %2 = arith.cmpi ne, %1, %c0_i32_0 : i32
    scf.if %2 {
      %c0_15 = arith.constant 0 : index
      %c0_16 = arith.constant 0 : index
      %20 = vector.load %arg2[%c0_15, %c0_16] : memref<8x10xf32, #tpu.memory_space<vmem>>, vector<8x10xf32>
      %21 = arith.truncf %20 : vector<8x10xf32> to vector<8x10xbf16>
      %c0_17 = arith.constant 0 : index
      %c0_18 = arith.constant 0 : index
      %22 = vector.load %arg3[%c0_17, %c0_18] : memref<10x1024xbf16, #tpu.memory_space<vmem>>, vector<10x1024xbf16>
      %cst_19 = arith.constant dense<0.000000e+00> : vector<8x1024xf32>
      %23 = tpu.matmul %21, %22, %cst_19 {dimension_numbers = #tpu.dot_dimension_numbers<[1], [0], [0], [1], [0, 0, 1, 1], [], []>} : vector<8x10xbf16>, vector<10x1024xbf16>, vector<8x1024xf32> -> vector<8x1024xf32>
      %c0_20 = arith.constant 0 : index
      %c0_21 = arith.constant 0 : index
      %24 = vector.load %arg4[%c0_20, %c0_21] : memref<1x1024xf32, #tpu.memory_space<vmem>>, vector<1x1024xf32>
      %25 = vector.broadcast %24 : vector<1x1024xf32> to vector<8x1024xf32>
      %26 = arith.addf %23, %25 : vector<8x1024xf32>
      %cst_22 = arith.constant 0.000000e+00 : f32
      %27 = vector.broadcast %cst_22 : f32 to vector<8x1024xf32>
      %28 = arith.maximumf %26, %27 : vector<8x1024xf32>
      %29 = arith.truncf %28 : vector<8x1024xf32> to vector<8x1024xbf16>
      %c0_23 = arith.constant 0 : index
      %c0_24 = arith.constant 0 : index
      %30 = vector.load %arg10[%c0_23, %c0_24] : memref<8x1024xbf16, #tpu.memory_space<vmem>>, vector<8x1024xbf16>
      tpu.vector_store %arg10[%c0_23, %c0_24], %29 {strides = array<i32>} : memref<8x1024xbf16, #tpu.memory_space<vmem>>, vector<8x1024xbf16>,
      %c0_25 = arith.constant 0 : index
      %c0_26 = arith.constant 0 : index
      %31 = vector.load %arg8[%c0_25, %c0_26] : memref<1x128xf32, #tpu.memory_space<vmem>>, vector<1x128xf32>
      %32 = vector.shape_cast %31 : vector<1x128xf32> to vector<1x128xf32>
      %33 = vector.broadcast %32 : vector<1x128xf32> to vector<8x128xf32>
      %c0_27 = arith.constant 0 : index
      %c0_28 = arith.constant 0 : index
      %34 = vector.load %arg11[%c0_27, %c0_28] : memref<8x128xf32, #tpu.memory_space<vmem>>, vector<8x128xf32>
      tpu.vector_store %arg11[%c0_27, %c0_28], %33 {strides = array<i32>} : memref<8x128xf32, #tpu.memory_space<vmem>>, vector<8x128xf32>,
    } else {
    }
    %c0 = arith.constant 0 : index
    %c0_1 = arith.constant 0 : index
    %3 = vector.load %arg10[%c0, %c0_1] : memref<8x1024xbf16, #tpu.memory_space<vmem>>, vector<8x1024xbf16>
    %c0_2 = arith.constant 0 : index
    %c0_3 = arith.constant 0 : index
    %4 = vector.load %arg5[%c0_2, %c0_3] : memref<1024x512xbf16, #tpu.memory_space<vmem>>, vector<1024x512xbf16>
    %cst = arith.constant dense<0.000000e+00> : vector<8x512xf32>
    %5 = tpu.matmul %3, %4, %cst {dimension_numbers = #tpu.dot_dimension_numbers<[1], [0], [0], [1], [0, 0, 1, 1], [], []>} : vector<8x1024xbf16>, vector<1024x512xbf16>, vector<8x512xf32> -> vector<8x512xf32>
    %c0_4 = arith.constant 0 : index
    %c0_5 = arith.constant 0 : index
    %6 = vector.load %arg6[%c0_4, %c0_5] : memref<1x512xf32, #tpu.memory_space<vmem>>, vector<1x512xf32>
    %7 = vector.broadcast %6 : vector<1x512xf32> to vector<8x512xf32>
    %8 = arith.addf %5, %7 : vector<8x512xf32>
    %cst_6 = arith.constant 0.000000e+00 : f32
    %9 = vector.broadcast %cst_6 : f32 to vector<8x512xf32>
    %10 = arith.maximumf %8, %9 : vector<8x512xf32>
    %11 = arith.truncf %10 : vector<8x512xf32> to vector<8x512xbf16>
    %c0_7 = arith.constant 0 : index
    %c0_8 = arith.constant 0 : index
    %12 = vector.load %arg11[%c0_7, %c0_8] : memref<8x128xf32, #tpu.memory_space<vmem>>, vector<8x128xf32>
    %c0_9 = arith.constant 0 : index
    %c0_10 = arith.constant 0 : index
    %13 = vector.load %arg7[%c0_9, %c0_10] : memref<512x128xbf16, #tpu.memory_space<vmem>>, vector<512x128xbf16>
    %cst_11 = arith.constant dense<0.000000e+00> : vector<8x128xf32>
    %14 = tpu.matmul %11, %13, %cst_11 {dimension_numbers = #tpu.dot_dimension_numbers<[1], [0], [0], [1], [0, 0, 1, 1], [], []>} : vector<8x512xbf16>, vector<512x128xbf16>, vector<8x128xf32> -> vector<8x128xf32>
    %15 = arith.addf %12, %14 : vector<8x128xf32>
    %c0_12 = arith.constant 0 : index
    %c0_13 = arith.constant 0 : index
    %16 = vector.load %arg11[%c0_12, %c0_13] : memref<8x128xf32, #tpu.memory_space<vmem>>, vector<8x128xf32>
    tpu.vector_store %arg11[%c0_12, %c0_13], %15 {strides = array<i32>} : memref<8x128xf32, #tpu.memory_space<vmem>>, vector<8x128xf32>,
    %c3_i32 = arith.constant 3 : i32
    %17 = arith.cmpi eq, %arg1, %c3_i32 : i32
    %18 = arith.extui %17 : i1 to i32
    %c0_i32_14 = arith.constant 0 : i32
    %19 = arith.cmpi ne, %18, %c0_i32_14 : i32
    scf.if %19 {
      %c0_15 = arith.constant 0 : index
      %c0_16 = arith.constant 0 : index
      %20 = vector.load %arg11[%c0_15, %c0_16] : memref<8x128xf32, #tpu.memory_space<vmem>>, vector<8x128xf32>
      %c0_17 = arith.constant 0 : index
      %c0_18 = arith.constant 0 : index
      %21 = vector.load %arg9[%c0_17, %c0_18] : memref<8x128xf32, #tpu.memory_space<vmem>>, vector<8x128xf32>
      tpu.vector_store %arg9[%c0_17, %c0_18], %20 {strides = array<i32>} : memref<8x128xf32, #tpu.memory_space<vmem>>, vector<8x128xf32>,
    } else {
    }
    return
  }
  func.func @transform_0(%arg0: i32, %arg1: i32) -> (i32, i32) {
    %c0_i32 = arith.constant 0 : i32
    %c0_i32_0 = arith.constant 0 : i32
    return %arg0, %c0_i32 : i32, i32
  }
  func.func @transform_1(%arg0: i32, %arg1: i32) -> (i32, i32) {
    %c0_i32 = arith.constant 0 : i32
    %c0_i32_0 = arith.constant 0 : i32
    %c0_i32_1 = arith.constant 0 : i32
    return %c0_i32, %c0_i32_0 : i32, i32
  }
  func.func @transform_2(%arg0: i32, %arg1: i32) -> (i32, i32) {
    %c0_i32 = arith.constant 0 : i32
    %c0_i32_0 = arith.constant 0 : i32
    %c0_i32_1 = arith.constant 0 : i32
    return %c0_i32, %c0_i32_0 : i32, i32
  }
  func.func @transform_3(%arg0: i32, %arg1: i32) -> (i32, i32) {
    %c0_i32 = arith.constant 0 : i32
    %c0_i32_0 = arith.constant 0 : i32
    return %c0_i32, %arg1 : i32, i32
  }
  func.func @transform_4(%arg0: i32, %arg1: i32) -> (i32, i32) {
    %c0_i32 = arith.constant 0 : i32
    %c0_i32_0 = arith.constant 0 : i32
    return %c0_i32, %arg1 : i32, i32
  }
  func.func @transform_5(%arg0: i32, %arg1: i32) -> (i32, i32) {
    %c0_i32 = arith.constant 0 : i32
    %c0_i32_0 = arith.constant 0 : i32
    return %arg1, %c0_i32 : i32, i32
  }
  func.func @transform_6(%arg0: i32, %arg1: i32) -> (i32, i32) {
    %c0_i32 = arith.constant 0 : i32
    %c0_i32_0 = arith.constant 0 : i32
    %c0_i32_1 = arith.constant 0 : i32
    return %c0_i32, %c0_i32_0 : i32, i32
  }
  func.func @transform_7(%arg0: i32, %arg1: i32) -> (i32, i32) {
    %c0_i32 = arith.constant 0 : i32
    %c0_i32_0 = arith.constant 0 : i32
    return %arg0, %c0_i32 : i32, i32
  }
}

</mosaic_0001>

<llo_original>
// kernel: tpu_custom_call.1
$region0: #{tpu_custom_call.1}
  #allocation0 [shape = 'u32[]', space=smem, size = 0x4, offset = 0x4, fixed_abs, tag = 'smem constant byte address 0x4 - core index']
  #allocation1 [shape = 'u32[72,128]{1,0:T(1,128)}', space=vmem, size = 0x9000, scoped, tag = 'internal scratch']
  #allocation2 [shape = 'bf16[8,1024]{1,0:T(8,128)(2,1)}', space=vmem, size = 0x4000, scoped, tag = 'scratch operand']
  #allocation3 [shape = 'f32[8,128]{1,0:T(8,128)}', space=vmem, size = 0x1000, scoped, tag = 'scratch operand']
  %s0 = inlined_call_operand.hbm [shape: f32[8,10], index: 0, kind: input, shape index: {}]
  %s1 = inlined_call_operand.hbm [shape: bf16[10,1024], index: 1, kind: input, shape index: {}]
  %s2 = inlined_call_operand.hbm [shape: f32[1,1024], index: 2, kind: input, shape index: {}]
  %s3 = inlined_call_operand.hbm [shape: bf16[1024,2048], index: 3, kind: input, shape index: {}]
  %s4 = inlined_call_operand.hbm [shape: f32[1,2048], index: 4, kind: input, shape index: {}]
  %s5 = inlined_call_operand.hbm [shape: bf16[2048,128], index: 5, kind: input, shape index: {}]
  %s6 = inlined_call_operand.hbm [shape: f32[1,128], index: 6, kind: input, shape index: {}]
  %s7 = inlined_call_operand.hbm [shape: f32[8,128], index: 7, kind: output, shape index: {}]
  %s8 = sld [smem:[#allocation0]]
  $region97: #{tpu_custom_call.1} parent=0
    _
  %s10 = ssub.s32 1, %s8
  %s11 = scalar_select 0, %s10, %s8
  $region1: #{tpu_custom_call.1} parent=0
    #allocation4 [shape = 'u8[4096]{0}', space=vmem, size = 0x1000, scoped, tag = 'input window, operand 0, single buffered']
    #allocation5 [shape = 's32[2]{0}', space=sflag, size = 0x8, scoped, tag = 'scoped memory for tpu_custom_call.1']
    #allocation6 [shape = 's32[2]{0}', space=sflag, size = 0x8, scoped, tag = 'scoped memory for tpu_custom_call.1']
    #allocation7 [shape = 'u8[32768]{0}', space=vmem, size = 0x8000, scoped, tag = 'input window, operand 1, single buffered']
    #allocation8 [shape = 's32[1]{0}', space=sflag, size = 0x4, scoped, tag = 'scoped memory for tpu_custom_call.1']
    #allocation9 [shape = 'u8[4096]{0}', space=vmem, size = 0x1000, scoped, tag = 'input window, operand 2, single buffered']
    #allocation10 [shape = 'u8[2097152]{0}', space=vmem, size = 0x200000, scoped, tag = 'input window, operand 3']
    #allocation11 [shape = 's32[2]{0}', space=sflag, size = 0x8, scoped, tag = 'scoped memory for tpu_custom_call.1']
    #allocation12 [shape = 'u8[4096]{0}', space=vmem, size = 0x1000, scoped, tag = 'input window, operand 4']
    #allocation13 [shape = 'u8[262144]{0}', space=vmem, size = 0x40000, scoped, tag = 'input window, operand 5']
    #allocation14 [shape = 's32[2]{0}', space=sflag, size = 0x8, scoped, tag = 'scoped memory for tpu_custom_call.1']
    #allocation15 [shape = 'u8[512]{0}', space=vmem, size = 0x400, scoped, tag = 'input window, operand 6, single buffered']
    #allocation16 [shape = 'u8[4096]{0}', space=vmem, size = 0x1000, scoped, tag = 'output window, operand 0, single buffered']
    %12 = vsyncpa [#allocation5], 0
    %13 = vsyncpa [#allocation8], 0
    %14 = vsyncpa [#allocation11], 0
    %s15 = scalar_lea.sflag [#allocation11], 1
    %16 = vsyncpa %s15, 0
    %17 = vsyncpa [#allocation14], 0
    %s18 = scalar_lea.sflag [#allocation14], 1
    %19 = vsyncpa %s18, 0
    %20 = vsyncpa [#allocation6], 0
    loop: start=0, step=1, limit=6
    $region2: #{tpu_custom_call.1} parent=1 // loop_pre_header
      _
    $region3: #{tpu_custom_call.1} parent=1 // loop_header
      %s22 = sphi 0, %s26
      %p23 = scmp.ge.s32.totalorder %s22, 6
      %s29 = sphi 0, %s41
      %s30 = sphi 0, %s37
      %s31 = sphi 0, %s29
      %s32 = sphi 0, %s30
      %s33 = sphi 0, %s31
      %s34 = sphi 0, %s32
      %s44 = sphi 0, %s46
      %s47 = sphi 0, %s44
      %s48 = sphi 0, %s47
      %s64 = sphi 0, %s48
      %s68 = sphi 0, %s68
      %s70 = sphi 0, %s68
      %s71 = sphi 0, %s70
      %s85 = sphi 0, %s71
      %s89 = sphi 0, %s89
      %s91 = sphi 0, %s89
      %s92 = sphi 0, %s91
      %s106 = sphi 0, %s92
      %s112 = sphi 0, %s114
      %s115 = sphi 0, %s112
      %s116 = sphi 0, %s115
      %s132 = sphi 0, %s116
      %s138 = sphi 0, %s140
      %s141 = sphi 0, %s138
      %s142 = sphi 0, %s141
      %s158 = sphi 0, %s142
      %s164 = sphi 0, %s166
      %s167 = sphi 0, %s164
      %s168 = sphi 0, %s167
      %s184 = sphi 0, %s168
      %s188 = sphi 0, %s188
      %s190 = sphi 0, %s188
      %s191 = sphi 0, %s190
      %s205 = sphi 0, %s191
      %s211 = sphi 0, %s213
      %s214 = sphi 0, %s211
      %s215 = sphi 0, %s214
      %s231 = sphi 0, %s215
    $region4: #{tpu_custom_call.1} parent=1 // loop_header_branch
      %25 = sbr.rel (%p23) target = $region8
    $region5: #{tpu_custom_call.1} parent=1 // loop_body
      %s27 = ssub.s32 %s22, 1
      %s28 = ssub.s32 %s22, 2
      %s35 = sadd.s32 1, %s30
      %p36 = scmp.ge.s32.totalorder %s35, 4
      %s37 = scalar_select %p36, 0, %s35
      %s38 = sadd.s32 1, %s29
      %s39 = scalar_select %p36, %s38, %s29
      %p40 = scmp.ge.s32.totalorder %s39, 1
      %s41 = scalar_select %p40, 0, %s39
      %s42 = ssub.s32 %s29, %s41
      %p43 = scmp.eq.s32.totalorder %s42, 0
      %s45 = sadd.s32 %s44, 1
      %s46 = scalar_select %p43, %s44, %s45
      %p49 = pneg %p43
      %p50 = scmp.eq.s32.totalorder %s22, 3
      %p51 = por %p49, %p50
      %p52 = scmp.ne.s32.totalorder %s44, %s47
      %p53 = scmp.eq.s32.totalorder %s22, 0
      %p54 = por %p52, %p53
      %p55 = scmp.ne.s32.totalorder %s44, %s47
      %p56 = scmp.eq.s32.totalorder %s27, 3
      %p57 = por %p55, %p56
      %p58 = scmp.ne.s32.totalorder %s47, %s48
      %p59 = scmp.eq.s32.totalorder %s27, 0
      %p60 = por %p58, %p59
      %p61 = scmp.ne.s32.totalorder %s47, %s48
      %p62 = scmp.eq.s32.totalorder %s28, 3
      %p63 = por %p61, %p62
      %p65 = scmp.ne.s32.totalorder %s48, %s64
      %p66 = scmp.eq.s32.totalorder %s28, 0
      %p67 = por %p65, %p66
      %s69 = sadd.s32 %s68, 1
      %p72 = scmp.eq.s32.totalorder %s22, 3
      %p73 = scmp.ne.s32.totalorder %s68, %s70
      %p74 = scmp.eq.s32.totalorder %s22, 0
      %p75 = por %p73, %p74
      %p76 = scmp.ne.s32.totalorder %s68, %s70
      %p77 = scmp.eq.s32.totalorder %s27, 3
      %p78 = por %p76, %p77
      %p79 = scmp.ne.s32.totalorder %s70, %s71
      %p80 = scmp.eq.s32.totalorder %s27, 0
      %p81 = por %p79, %p80
      %p82 = scmp.ne.s32.totalorder %s70, %s71
      %p83 = scmp.eq.s32.totalorder %s28, 3
      %p84 = por %p82, %p83
      %p86 = scmp.ne.s32.totalorder %s71, %s85
      %p87 = scmp.eq.s32.totalorder %s28, 0
      %p88 = por %p86, %p87
      %s90 = sadd.s32 %s89, 1
      %p93 = scmp.eq.s32.totalorder %s22, 3
      %p94 = scmp.ne.s32.totalorder %s89, %s91
      %p95 = scmp.eq.s32.totalorder %s22, 0
      %p96 = por %p94, %p95
      %p97 = scmp.ne.s32.totalorder %s89, %s91
      %p98 = scmp.eq.s32.totalorder %s27, 3
      %p99 = por %p97, %p98
      %p100 = scmp.ne.s32.totalorder %s91, %s92
      %p101 = scmp.eq.s32.totalorder %s27, 0
      %p102 = por %p100, %p101
      %p103 = scmp.ne.s32.totalorder %s91, %s92
      %p104 = scmp.eq.s32.totalorder %s28, 3
      %p105 = por %p103, %p104
      %p107 = scmp.ne.s32.totalorder %s92, %s106
      %p108 = scmp.eq.s32.totalorder %s28, 0
      %p109 = por %p107, %p108
      %s110 = ssub.s32 %s30, %s37
      %p111 = scmp.eq.s32.totalorder %s110, 0
      %s113 = sadd.s32 %s112, 1
      %s114 = scalar_select %p111, %s112, %s113
      %p117 = pneg %p111
      %p118 = scmp.eq.s32.totalorder %s22, 3
      %p119 = por %p117, %p118
      %p120 = scmp.ne.s32.totalorder %s112, %s115
      %p121 = scmp.eq.s32.totalorder %s22, 0
      %p122 = por %p120, %p121
      %p123 = scmp.ne.s32.totalorder %s112, %s115
      %p124 = scmp.eq.s32.totalorder %s27, 3
      %p125 = por %p123, %p124
      %p126 = scmp.ne.s32.totalorder %s115, %s116
      %p127 = scmp.eq.s32.totalorder %s27, 0
      %p128 = por %p126, %p127
      %p129 = scmp.ne.s32.totalorder %s115, %s116
      %p130 = scmp.eq.s32.totalorder %s28, 3
      %p131 = por %p129, %p130
      %p133 = scmp.ne.s32.totalorder %s116, %s132
      %p134 = scmp.eq.s32.totalorder %s28, 0
      %p135 = por %p133, %p134
      %s136 = ssub.s32 %s30, %s37
      %p137 = scmp.eq.s32.totalorder %s136, 0
      %s139 = sadd.s32 %s138, 1
      %s140 = scalar_select %p137, %s138, %s139
      %p143 = pneg %p137
      %p144 = scmp.eq.s32.totalorder %s22, 3
      %p145 = por %p143, %p144
      %p146 = scmp.ne.s32.totalorder %s138, %s141
      %p147 = scmp.eq.s32.totalorder %s22, 0
      %p148 = por %p146, %p147
      %p149 = scmp.ne.s32.totalorder %s138, %s141
      %p150 = scmp.eq.s32.totalorder %s27, 3
      %p151 = por %p149, %p150
      %p152 = scmp.ne.s32.totalorder %s141, %s142
      %p153 = scmp.eq.s32.totalorder %s27, 0
      %p154 = por %p152, %p153
      %p155 = scmp.ne.s32.totalorder %s141, %s142
      %p156 = scmp.eq.s32.totalorder %s28, 3
      %p157 = por %p155, %p156
      %p159 = scmp.ne.s32.totalorder %s142, %s158
      %p160 = scmp.eq.s32.totalorder %s28, 0
      %p161 = por %p159, %p160
      %s162 = ssub.s32 %s30, %s37
      %p163 = scmp.eq.s32.totalorder %s162, 0
      %s165 = sadd.s32 %s164, 1
      %s166 = scalar_select %p163, %s164, %s165
      %p169 = pneg %p163
      %p170 = scmp.eq.s32.totalorder %s22, 3
      %p171 = por %p169, %p170
      %p172 = scmp.ne.s32.totalorder %s164, %s167
      %p173 = scmp.eq.s32.totalorder %s22, 0
      %p174 = por %p172, %p173
      %p175 = scmp.ne.s32.totalorder %s164, %s167
      %p176 = scmp.eq.s32.totalorder %s27, 3
      %p177 = por %p175, %p176
      %p178 = scmp.ne.s32.totalorder %s167, %s168
      %p179 = scmp.eq.s32.totalorder %s27, 0
      %p180 = por %p178, %p179
      %p181 = scmp.ne.s32.totalorder %s167, %s168
      %p182 = scmp.eq.s32.totalorder %s28, 3
      %p183 = por %p181, %p182
      %p185 = scmp.ne.s32.totalorder %s168, %s184
      %p186 = scmp.eq.s32.totalorder %s28, 0
      %p187 = por %p185, %p186
      %s189 = sadd.s32 %s188, 1
      %p192 = scmp.eq.s32.totalorder %s22, 3
      %p193 = scmp.ne.s32.totalorder %s188, %s190
      %p194 = scmp.eq.s32.totalorder %s22, 0
      %p195 = por %p193, %p194
      %p196 = scmp.ne.s32.totalorder %s188, %s190
      %p197 = scmp.eq.s32.totalorder %s27, 3
      %p198 = por %p196, %p197
      %p199 = scmp.ne.s32.totalorder %s190, %s191
      %p200 = scmp.eq.s32.totalorder %s27, 0
      %p201 = por %p199, %p200
      %p202 = scmp.ne.s32.totalorder %s190, %s191
      %p203 = scmp.eq.s32.totalorder %s28, 3
      %p204 = por %p202, %p203
      %p206 = scmp.ne.s32.totalorder %s191, %s205
      %p207 = scmp.eq.s32.totalorder %s28, 0
      %p208 = por %p206, %p207
      %s209 = ssub.s32 %s29, %s41
      %p210 = scmp.eq.s32.totalorder %s209, 0
      %s212 = sadd.s32 %s211, 1
      %s213 = scalar_select %p210, %s211, %s212
      %p216 = pneg %p210
      %p217 = scmp.eq.s32.totalorder %s22, 3
      %p218 = por %p216, %p217
      %p219 = scmp.ne.s32.totalorder %s211, %s214
      %p220 = scmp.eq.s32.totalorder %s22, 0
      %p221 = por %p219, %p220
      %p222 = scmp.ne.s32.totalorder %s211, %s214
      %p223 = scmp.eq.s32.totalorder %s27, 3
      %p224 = por %p222, %p223
      %p225 = scmp.ne.s32.totalorder %s214, %s215
      %p226 = scmp.eq.s32.totalorder %s27, 0
      %p227 = por %p225, %p226
      %p228 = scmp.ne.s32.totalorder %s214, %s215
      %p229 = scmp.eq.s32.totalorder %s28, 3
      %p230 = por %p228, %p229
      %p232 = scmp.ne.s32.totalorder %s215, %s231
      %p233 = scmp.eq.s32.totalorder %s28, 0
      %p234 = por %p232, %p233
      %p235 = scmp.le.s32.totalorder 1, %s22
      %p236 = scmp.lt.s32.totalorder %s22, 5
      %p237 = pnand %p235, %p236
      %p238 = pneg %p237
      // Predicated region
      $region9: #{tpu_custom_call.1} parent=5 // pred_check
        _
      $region10: #{tpu_custom_call.1} parent=5 // pred_check_branch
        %240 = sbr.rel (%p237) target = $region12
      $region11: #{tpu_custom_call.1} parent=5 // pred_region
        %s241 = ssub.s32 %s22, 1
        // Predicated region
        $region13: #{tpu_custom_call.1} parent=11 // pred_check
          %p242 = pneg %p60
        $region14: #{tpu_custom_call.1} parent=11 // pred_check_branch
          %244 = sbr.rel (%p242) target = $region16
        $region15: #{tpu_custom_call.1} parent=11 // pred_region
          %246 = vsyncadd [#allocation5], 0
          %s247 = smul.addr %s31, 8
          %s248 = scalar_lea.hbm %s0, %s247
          %s250 = sshll.u32 %s248, 4
          %s251 = int_to_ptr.hbm [resolvable:$true] %s250
          %s252 = sshll.u32 [#allocation4], 4
          %s253 = int_to_ptr.vmem [resolvable:$true] %s252
          %255 = dma.hbm_to_vmem [thread:$0]  %s251, 128, %s253, [#allocation5]
        $region16: #{tpu_custom_call.1} parent=11 // pred_fallthru
          _
        // Predicated region
        $region17: #{tpu_custom_call.1} parent=11 // pred_check
          %p256 = pneg %p81
        $region18: #{tpu_custom_call.1} parent=11 // pred_check_branch
          %258 = sbr.rel (%p256) target = $region20
        $region19: #{tpu_custom_call.1} parent=11 // pred_region
          %260 = vsyncadd [#allocation8], 0
          %s261 = sshll.u32 %s1, 4
          %s262 = int_to_ptr.hbm [resolvable:$true] %s261
          %s263 = sshll.u32 [#allocation7], 4
          %s264 = int_to_ptr.vmem [resolvable:$true] %s263
          %269 = dma.hbm_to_vmem [thread:$0]  %s262, 1024, %s264, [#allocation8], 512, 512, 32
        $region20: #{tpu_custom_call.1} parent=11 // pred_fallthru
          _
        // Predicated region
        $region21: #{tpu_custom_call.1} parent=11 // pred_check
          %p270 = pneg %p102
        $region22: #{tpu_custom_call.1} parent=11 // pred_check_branch
          %272 = sbr.rel (%p270) target = $region24
        $region23: #{tpu_custom_call.1} parent=11 // pred_region
          %274 = vsyncadd [#allocation8], 0
          %s276 = sshll.u32 %s2, 4
          %s277 = int_to_ptr.hbm [resolvable:$true] %s276
          %s278 = sshll.u32 [#allocation9], 4
          %s279 = int_to_ptr.vmem [resolvable:$true] %s278
          %281 = dma.hbm_to_vmem [thread:$0]  %s277, 128, %s279, [#allocation8]
        $region24: #{tpu_custom_call.1} parent=11 // pred_fallthru
          _
        // Predicated region
        $region25: #{tpu_custom_call.1} parent=11 // pred_check
          %p282 = pneg %p201
        $region26: #{tpu_custom_call.1} parent=11 // pred_check_branch
          %284 = sbr.rel (%p282) target = $region28
        $region27: #{tpu_custom_call.1} parent=11 // pred_region
          %286 = vsyncadd [#allocation14], 0
          %s288 = sshll.u32 %s6, 4
          %s289 = int_to_ptr.hbm [resolvable:$true] %s288
          %s290 = sshll.u32 [#allocation15], 4
          %s291 = int_to_ptr.vmem [resolvable:$true] %s290
          %293 = dma.hbm_to_vmem [thread:$0]  %s289, 16, %s291, [#allocation14]
        $region28: #{tpu_custom_call.1} parent=11 // pred_fallthru
          _
      $region12: #{tpu_custom_call.1} parent=5 // pred_fallthru
        _
      %p294 = scmp.lt.s32.totalorder %s22, 4
      // Predicated region
      $region29: #{tpu_custom_call.1} parent=5 // pred_check
        %p295 = pneg %p294
      $region30: #{tpu_custom_call.1} parent=5 // pred_check_branch
        %297 = sbr.rel (%p295) target = $region32
      $region31: #{tpu_custom_call.1} parent=5 // pred_region
        // Predicated region
        $region33: #{tpu_custom_call.1} parent=31 // pred_check
          %p298 = pneg %p122
        $region34: #{tpu_custom_call.1} parent=31 // pred_check_branch
          %300 = sbr.rel (%p298) target = $region36
        $region35: #{tpu_custom_call.1} parent=31 // pred_region
          %s301 = sand.u32 %s22, 1
          %s302 = scalar_lea.sflag [#allocation11], %s301
          %s303 = sand.u32 %s112, 1
          %s304 = smul.addr %s303, 2048
          %s305 = scalar_lea.vmem [#allocation10], %s304
          %s306 = smul.u32 4, %s30
          %308 = vsyncadd %s302, 0
          %s309 = smul.addr %s306, 4
          %s310 = scalar_lea.hbm %s3, %s309
          %s311 = sshll.u32 %s310, 4
          %s312 = int_to_ptr.hbm [resolvable:$true] %s311
          %s313 = sshll.u32 %s305, 4
          %s314 = int_to_ptr.vmem [resolvable:$true] %s313
          %319 = dma.hbm_to_vmem [thread:$0]  %s312, 32768, %s314, %s302, 1024, 256, 16
        $region36: #{tpu_custom_call.1} parent=31 // pred_fallthru
          _
        // Predicated region
        $region37: #{tpu_custom_call.1} parent=31 // pred_check
          %p320 = pneg %p148
        $region38: #{tpu_custom_call.1} parent=31 // pred_check_branch
          %322 = sbr.rel (%p320) target = $region40
        $region39: #{tpu_custom_call.1} parent=31 // pred_region
          %s323 = sand.u32 %s22, 1
          %s324 = scalar_lea.sflag [#allocation11], %s323
          %s325 = sand.u32 %s138, 1
          %s326 = smul.addr %s325, 4
          %s327 = scalar_lea.vmem [#allocation12], %s326
          %s328 = smul.u32 4, %s30
          %330 = vsyncadd %s324, 0
          %s331 = scalar_lea.hbm %s4, %s328
          %s333 = sshll.u32 %s331, 4
          %s334 = int_to_ptr.hbm [resolvable:$true] %s333
          %s335 = sshll.u32 %s327, 4
          %s336 = int_to_ptr.vmem [resolvable:$true] %s335
          %338 = dma.hbm_to_vmem [thread:$0]  %s334, 64, %s336, %s324
        $region40: #{tpu_custom_call.1} parent=31 // pred_fallthru
          _
        // Predicated region
        $region41: #{tpu_custom_call.1} parent=31 // pred_check
          %p339 = pneg %p174
        $region42: #{tpu_custom_call.1} parent=31 // pred_check_branch
          %341 = sbr.rel (%p339) target = $region44
        $region43: #{tpu_custom_call.1} parent=31 // pred_region
          %s342 = sand.u32 %s22, 1
          %s343 = scalar_lea.sflag [#allocation14], %s342
          %s344 = sand.u32 %s164, 1
          %s345 = smul.addr %s344, 256
          %s346 = scalar_lea.vmem [#allocation13], %s345
          %s347 = smul.u32 64, %s30
          %349 = vsyncadd %s343, 0
          %s350 = smul.addr %s347, 4
          %s351 = scalar_lea.hbm %s5, %s350
          %s352 = sshll.u32 %s351, 4
          %s353 = int_to_ptr.hbm [resolvable:$true] %s352
          %s354 = sshll.u32 %s346, 4
          %s355 = int_to_ptr.vmem [resolvable:$true] %s354
          %360 = dma.hbm_to_vmem [thread:$0]  %s353, 4096, %s355, %s343, 64, 64, 4
        $region44: #{tpu_custom_call.1} parent=31 // pred_fallthru
          _
      $region32: #{tpu_custom_call.1} parent=5 // pred_fallthru
        _
      %p361 = scmp.le.s32.totalorder 1, %s22
      %p362 = scmp.lt.s32.totalorder %s22, 5
      %p363 = pnand %p361, %p362
      %p364 = pneg %p363
      // Predicated region
      $region45: #{tpu_custom_call.1} parent=5 // pred_check
        _
      $region46: #{tpu_custom_call.1} parent=5 // pred_check_branch
        %366 = sbr.rel (%p363) target = $region48
      $region47: #{tpu_custom_call.1} parent=5 // pred_region
        %s367 = ssub.s32 %s22, 1
        // Predicated region
        $region49: #{tpu_custom_call.1} parent=47 // pred_check
          %p368 = pneg %p60
        $region50: #{tpu_custom_call.1} parent=47 // pred_check_branch
          %370 = sbr.rel (%p368) target = $region52
        $region51: #{tpu_custom_call.1} parent=47 // pred_region
          %372 = dma.done [#allocation5], 128
        $region52: #{tpu_custom_call.1} parent=47 // pred_fallthru
          _
        // Predicated region
        $region53: #{tpu_custom_call.1} parent=47 // pred_check
          %p373 = pneg %p81
        $region54: #{tpu_custom_call.1} parent=47 // pred_check_branch
          %375 = sbr.rel (%p373) target = $region56
        $region55: #{tpu_custom_call.1} parent=47 // pred_region
          %377 = dma.done [#allocation8], 1024
        $region56: #{tpu_custom_call.1} parent=47 // pred_fallthru
          _
        // Predicated region
        $region57: #{tpu_custom_call.1} parent=47 // pred_check
          %p378 = pneg %p102
        $region58: #{tpu_custom_call.1} parent=47 // pred_check_branch
          %380 = sbr.rel (%p378) target = $region60
        $region59: #{tpu_custom_call.1} parent=47 // pred_region
          %382 = dma.done [#allocation8], 128
        $region60: #{tpu_custom_call.1} parent=47 // pred_fallthru
          _
        %s383 = sand.u32 %s27, 1
        %s384 = scalar_lea.sflag [#allocation11], %s383
        %s385 = sand.u32 %s115, 1
        %s386 = smul.addr %s385, 2048
        %s387 = scalar_lea.vmem [#allocation10], %s386
        // Predicated region
        $region61: #{tpu_custom_call.1} parent=47 // pred_check
          %p388 = pneg %p128
        $region62: #{tpu_custom_call.1} parent=47 // pred_check_branch
          %390 = sbr.rel (%p388) target = $region64
        $region63: #{tpu_custom_call.1} parent=47 // pred_region
          %392 = dma.done %s384, 32768
        $region64: #{tpu_custom_call.1} parent=47 // pred_fallthru
          _
        %s393 = sand.u32 %s27, 1
        %s394 = scalar_lea.sflag [#allocation11], %s393
        %s395 = sand.u32 %s141, 1
        %s396 = smul.addr %s395, 4
        %s397 = scalar_lea.vmem [#allocation12], %s396
        // Predicated region
        $region65: #{tpu_custom_call.1} parent=47 // pred_check
          %p398 = pneg %p154
        $region66: #{tpu_custom_call.1} parent=47 // pred_check_branch
          %400 = sbr.rel (%p398) target = $region68
        $region67: #{tpu_custom_call.1} parent=47 // pred_region
          %402 = dma.done %s394, 64
        $region68: #{tpu_custom_call.1} parent=47 // pred_fallthru
          _
        %s403 = sand.u32 %s27, 1
        %s404 = scalar_lea.sflag [#allocation14], %s403
        %s405 = sand.u32 %s167, 1
        %s406 = smul.addr %s405, 256
        %s407 = scalar_lea.vmem [#allocation13], %s406
        // Predicated region
        $region69: #{tpu_custom_call.1} parent=47 // pred_check
          %p408 = pneg %p180
        $region70: #{tpu_custom_call.1} parent=47 // pred_check_branch
          %410 = sbr.rel (%p408) target = $region72
        $region71: #{tpu_custom_call.1} parent=47 // pred_region
          %412 = dma.done %s404, 4096
        $region72: #{tpu_custom_call.1} parent=47 // pred_fallthru
          _
        // Predicated region
        $region73: #{tpu_custom_call.1} parent=47 // pred_check
          %p413 = pneg %p201
        $region74: #{tpu_custom_call.1} parent=47 // pred_check_branch
          %415 = sbr.rel (%p413) target = $region76
        $region75: #{tpu_custom_call.1} parent=47 // pred_region
          %417 = dma.done [#allocation14], 16
        $region76: #{tpu_custom_call.1} parent=47 // pred_fallthru
          _
        %p418 = pneg %p60
        %p419 = pneg %p57
        %p420 = pneg %p81
        %p421 = pneg %p78
        %p422 = pneg %p102
        %p423 = pneg %p99
        %s424 = sand.u32 %s27, 1
        %s425 = scalar_lea.sflag [#allocation11], %s424
        %s426 = sand.u32 %s115, 1
        %s427 = smul.addr %s426, 2048
        %s428 = scalar_lea.vmem [#allocation10], %s427
        %p429 = pneg %p128
        %p430 = pneg %p125
        %s431 = sand.u32 %s27, 1
        %s432 = scalar_lea.sflag [#allocation11], %s431
        %s433 = sand.u32 %s141, 1
        %s434 = smul.addr %s433, 4
        %s435 = scalar_lea.vmem [#allocation12], %s434
        %p436 = pneg %p154
        %p437 = pneg %p151
        %s438 = sand.u32 %s27, 1
        %s439 = scalar_lea.sflag [#allocation14], %s438
        %s440 = sand.u32 %s167, 1
        %s441 = smul.addr %s440, 256
        %s442 = scalar_lea.vmem [#allocation13], %s441
        %p443 = pneg %p180
        %p444 = pneg %p177
        %p445 = pneg %p201
        %p446 = pneg %p198
        %p447 = pneg %p227
        %p448 = pneg %p224
        %s449 = smul.u32 4, %s32
        %s450 = smul.u32 4, %s32
        %s451 = smul.u32 64, %s32
        %p453 = scmp.eq.s32.totalorder %s32, 0
        // Predicated region
        $region77: #{tpu_custom_call.1} parent=47 // pred_check
          %p454 = pneg %p453
        $region78: #{tpu_custom_call.1} parent=47 // pred_check_branch
          %456 = sbr.rel (%p454) target = $region80
        $region79: #{tpu_custom_call.1} parent=47 // pred_region
          %v457 = vld [vmem:[#allocation4] sm:$0xff]
          %v458 = vpack.c.bf16 %v457, %v457
          %v459 = vld [vmem:[#allocation7] sm:$0xff]
          %v460 = vld [vmem:[#allocation7 + $0x8] sm:$0xff]
          %v461 = vld [vmem:[#allocation7 + $0x10] sm:$0xff]
          %v462 = vld [vmem:[#allocation7 + $0x18] sm:$0xff]
          %v463 = vld [vmem:[#allocation7 + $0x20] sm:$0x11]
          %v464 = vld [vmem:[#allocation7 + $0x28] sm:$0x11]
          %v465 = vld [vmem:[#allocation7 + $0x30] sm:$0x11]
          %v466 = vld [vmem:[#allocation7 + $0x38] sm:$0x11]
          %v467 = vld [vmem:[#allocation9] sm:$0xff]
          %v469 = vperm.slane %v467, 0
          %v470 = vperm.slane %v467, 1
          %v471 = vperm.slane %v467, 2
          %v472 = vperm.slane %v467, 3
          %v473 = vperm.slane %v467, 4
          %v474 = vperm.slane %v467, 5
          %v475 = vperm.slane %v467, 6
          %v476 = vperm.slane %v467, 7
          %v493 = vunpack.c.l.b16 %v459
          %v494 = vunpack.c.h.b16 %v459
          %v495 = vunpack.c.l.b16 %v460
          %v496 = vunpack.c.h.b16 %v460
          %v497 = vunpack.c.l.b16 %v461
          %v498 = vunpack.c.h.b16 %v461
          %v499 = vunpack.c.l.b16 %v462
          %v500 = vunpack.c.h.b16 %v462
          %v501 = vunpack.c.l.b16 %v463
          %v502 = vunpack.c.h.b16 %v463
          %v503 = vunpack.c.l.b16 %v464
          %v504 = vunpack.c.h.b16 %v464
          %v505 = vunpack.c.l.b16 %v465
          %v506 = vunpack.c.h.b16 %v465
          %v507 = vunpack.c.l.b16 %v466
          %v508 = vunpack.c.h.b16 %v466
          %v509 = vpack.c.b16 %v501, %v493
          %v510 = vpack.c.b16 %v502, %v494
          %v511 = vpack.c.b16 %v503, %v495
          %v512 = vpack.c.b16 %v504, %v496
          %v513 = vpack.c.b16 %v505, %v497
          %v514 = vpack.c.b16 %v506, %v498
          %v515 = vpack.c.b16 %v507, %v499
          %v516 = vpack.c.b16 %v508, %v500
          %vm517 = vcmask 80896
          %v519 = vsel %vm517, %v458, 0
          %vm521 = vcmask 1044480
          %v523 = vsel %vm521, %v509, 0
          %v526 = vsel %vm521, %v510, 0
          %v529 = vsel %vm521, %v511, 0
          %v532 = vsel %vm521, %v512, 0
          %v535 = vsel %vm521, %v513, 0
          %v538 = vsel %vm521, %v514, 0
          %v541 = vsel %vm521, %v515, 0
          %v544 = vsel %vm521, %v516, 0
          %546 = vmatpush.bf16.msra.mxu0 0
          %547 = vmatpush.bf16.msra.mxu0 0
          %548 = vmatpush.bf16.msra.mxu0 0
          %549 = vmatpush.bf16.msra.mxu0 0
          %550 = vmatpush.bf16.msra.mxu0 0
          %551 = vmatpush.bf16.msra.mxu0 0
          %552 = vmatpush.bf16.msra.mxu0 0
          %553 = vmatpush.bf16.msra.mxu0 %v523
          %554 = vmatmul.bf16.gmra.mxu0 %v519
          %v555 = vpop.f32.mrf.mxu0
          %v556 = vadd.f32 %v469, %v555
          %v557 = vpop.f32.mrf.mxu0
          %558 = vdwg.mxu0
          %559 = vmatpush.bf16.msra.mxu0 0
          %560 = vmatpush.bf16.msra.mxu0 0
          %561 = vmatpush.bf16.msra.mxu0 0
          %562 = vmatpush.bf16.msra.mxu0 0
          %563 = vmatpush.bf16.msra.mxu0 0
          %564 = vmatpush.bf16.msra.mxu0 0
          %565 = vmatpush.bf16.msra.mxu0 0
          %566 = vmatpush.bf16.msra.mxu0 %v526
          %567 = vmatmul.bf16.gmra.mxu0 %v519
          %v568 = vpop.f32.mrf.mxu0
          %v569 = vadd.f32 %v470, %v568
          %v570 = vpop.f32.mrf.mxu0
          %571 = vdwg.mxu0
          %572 = vmatpush.bf16.msra.mxu0 0
          %573 = vmatpush.bf16.msra.mxu0 0
          %574 = vmatpush.bf16.msra.mxu0 0
          %575 = vmatpush.bf16.msra.mxu0 0
          %576 = vmatpush.bf16.msra.mxu0 0
          %577 = vmatpush.bf16.msra.mxu0 0
          %578 = vmatpush.bf16.msra.mxu0 0
          %579 = vmatpush.bf16.msra.mxu0 %v529
          %580 = vmatmul.bf16.gmra.mxu0 %v519
          %v581 = vpop.f32.mrf.mxu0
          %v582 = vadd.f32 %v471, %v581
          %v583 = vpop.f32.mrf.mxu0
          %584 = vdwg.mxu0
          %585 = vmatpush.bf16.msra.mxu0 0
          %586 = vmatpush.bf16.msra.mxu0 0
          %587 = vmatpush.bf16.msra.mxu0 0
          %588 = vmatpush.bf16.msra.mxu0 0
          %589 = vmatpush.bf16.msra.mxu0 0
          %590 = vmatpush.bf16.msra.mxu0 0
          %591 = vmatpush.bf16.msra.mxu0 0
          %592 = vmatpush.bf16.msra.mxu0 %v532
          %593 = vmatmul.bf16.gmra.mxu0 %v519
          %v594 = vpop.f32.mrf.mxu0
          %v595 = vadd.f32 %v472, %v594
          %v596 = vpop.f32.mrf.mxu0
          %597 = vdwg.mxu0
          %598 = vmatpush.bf16.msra.mxu0 0
          %599 = vmatpush.bf16.msra.mxu0 0
          %600 = vmatpush.bf16.msra.mxu0 0
          %601 = vmatpush.bf16.msra.mxu0 0
          %602 = vmatpush.bf16.msra.mxu0 0
          %603 = vmatpush.bf16.msra.mxu0 0
          %604 = vmatpush.bf16.msra.mxu0 0
          %605 = vmatpush.bf16.msra.mxu0 %v535
          %606 = vmatmul.bf16.gmra.mxu0 %v519
          %v607 = vpop.f32.mrf.mxu0
          %v608 = vadd.f32 %v473, %v607
          %v609 = vpop.f32.mrf.mxu0
          %610 = vdwg.mxu0
          %611 = vmatpush.bf16.msra.mxu0 0
          %612 = vmatpush.bf16.msra.mxu0 0
          %613 = vmatpush.bf16.msra.mxu0 0
          %614 = vmatpush.bf16.msra.mxu0 0
          %615 = vmatpush.bf16.msra.mxu0 0
          %616 = vmatpush.bf16.msra.mxu0 0
          %617 = vmatpush.bf16.msra.mxu0 0
          %618 = vmatpush.bf16.msra.mxu0 %v538
          %619 = vmatmul.bf16.gmra.mxu0 %v519
          %v620 = vpop.f32.mrf.mxu0
          %v621 = vadd.f32 %v474, %v620
          %v622 = vpop.f32.mrf.mxu0
          %623 = vdwg.mxu0
          %624 = vmatpush.bf16.msra.mxu0 0
          %625 = vmatpush.bf16.msra.mxu0 0
          %626 = vmatpush.bf16.msra.mxu0 0
          %627 = vmatpush.bf16.msra.mxu0 0
          %628 = vmatpush.bf16.msra.mxu0 0
          %629 = vmatpush.bf16.msra.mxu0 0
          %630 = vmatpush.bf16.msra.mxu0 0
          %631 = vmatpush.bf16.msra.mxu0 %v541
          %632 = vmatmul.bf16.gmra.mxu0 %v519
          %v633 = vpop.f32.mrf.mxu0
          %v634 = vadd.f32 %v475, %v633
          %v635 = vpop.f32.mrf.mxu0
          %636 = vdwg.mxu0
          %637 = vmatpush.bf16.msra.mxu0 0
          %638 = vmatpush.bf16.msra.mxu0 0
          %639 = vmatpush.bf16.msra.mxu0 0
          %640 = vmatpush.bf16.msra.mxu0 0
          %641 = vmatpush.bf16.msra.mxu0 0
          %642 = vmatpush.bf16.msra.mxu0 0
          %643 = vmatpush.bf16.msra.mxu0 0
          %644 = vmatpush.bf16.msra.mxu0 %v544
          %645 = vmatmul.bf16.gmra.mxu0 %v519
          %v646 = vpop.f32.mrf.mxu0
          %v647 = vadd.f32 %v476, %v646
          %v648 = vpop.f32.mrf.mxu0
          %649 = vdwg.mxu0
          %v650 = vmax.f32 %v556, 0.0
          %v651 = vmax.f32 %v569, 0.0
          %v652 = vmax.f32 %v582, 0.0
          %v653 = vmax.f32 %v595, 0.0
          %v654 = vmax.f32 %v608, 0.0
          %v655 = vmax.f32 %v621, 0.0
          %v656 = vmax.f32 %v634, 0.0
          %v657 = vmax.f32 %v647, 0.0
          %v658 = vpack.c.bf16 %v651, %v650
          %v659 = vpack.c.bf16 %v653, %v652
          %v660 = vpack.c.bf16 %v655, %v654
          %v661 = vpack.c.bf16 %v657, %v656
          %662 = vst [vmem:[#allocation2] sm:$0xff] %v658
          %663 = vst [vmem:[#allocation2 + $0x8] sm:$0xff] %v659
          %664 = vst [vmem:[#allocation2 + $0x10] sm:$0xff] %v660
          %665 = vst [vmem:[#allocation2 + $0x18] sm:$0xff] %v661
          %v666 = vld [vmem:[#allocation15] sm:$0x1]
          %v668 = vperm.slane %v666, 0
          %670 = vst [vmem:[#allocation3] sm:$0xff] %v668
        $region80: #{tpu_custom_call.1} parent=47 // pred_fallthru
          _
        %v671 = vld [vmem:[#allocation2] sm:$0xff]
        %v672 = vld [vmem:[#allocation2 + $0x8] sm:$0xff]
        %v673 = vld [vmem:[#allocation2 + $0x10] sm:$0xff]
        %v674 = vld [vmem:[#allocation2 + $0x18] sm:$0xff]
        %v675 = vld [vmem:[%s387] sm:$0xff]
        %v676 = vld [vmem:[%s387 + $0x8] sm:$0xff]
        %v677 = vld [vmem:[%s387 + $0x10] sm:$0xff]
        %v678 = vld [vmem:[%s387 + $0x18] sm:$0xff]
        %v679 = vld [vmem:[%s387 + $0x20] sm:$0xff]
        %v680 = vld [vmem:[%s387 + $0x28] sm:$0xff]
        %v681 = vld [vmem:[%s387 + $0x30] sm:$0xff]
        %v682 = vld [vmem:[%s387 + $0x38] sm:$0xff]
        %v683 = vld [vmem:[%s387 + $0x40] sm:$0xff]
        %v684 = vld [vmem:[%s387 + $0x48] sm:$0xff]
        %v685 = vld [vmem:[%s387 + $0x50] sm:$0xff]
        %v686 = vld [vmem:[%s387 + $0x58] sm:$0xff]
        %v687 = vld [vmem:[%s387 + $0x60] sm:$0xff]
        %v688 = vld [vmem:[%s387 + $0x68] sm:$0xff]
        %v689 = vld [vmem:[%s387 + $0x70] sm:$0xff]
        %v690 = vld [vmem:[%s387 + $0x78] sm:$0xff]
        %v691 = vld [vmem:[%s387 + $0x80] sm:$0xff]
        %v692 = vld [vmem:[%s387 + $0x88] sm:$0xff]
        %v693 = vld [vmem:[%s387 + $0x90] sm:$0xff]
        %v694 = vld [vmem:[%s387 + $0x98] sm:$0xff]
        %v695 = vld [vmem:[%s387 + $0xa0] sm:$0xff]
        %v696 = vld [vmem:[%s387 + $0xa8] sm:$0xff]
        %v697 = vld [vmem:[%s387 + $0xb0] sm:$0xff]
        %v698 = vld [vmem:[%s387 + $0xb8] sm:$0xff]
        %v699 = vld [vmem:[%s387 + $0xc0] sm:$0xff]
        %v700 = vld [vmem:[%s387 + $0xc8] sm:$0xff]
        %v701 = vld [vmem:[%s387 + $0xd0] sm:$0xff]
        %v702 = vld [vmem:[%s387 + $0xd8] sm:$0xff]
        %v703 = vld [vmem:[%s387 + $0xe0] sm:$0xff]
        %v704 = vld [vmem:[%s387 + $0xe8] sm:$0xff]
        %v705 = vld [vmem:[%s387 + $0xf0] sm:$0xff]
        %v706 = vld [vmem:[%s387 + $0xf8] sm:$0xff]
        %v707 = vld [vmem:[%s387 + $0x100] sm:$0xff]
        %v708 = vld [vmem:[%s387 + $0x108] sm:$0xff]
        %v709 = vld [vmem:[%s387 + $0x110] sm:$0xff]
        %v710 = vld [vmem:[%s387 + $0x118] sm:$0xff]
        %v711 = vld [vmem:[%s387 + $0x120] sm:$0xff]
        %v712 = vld [vmem:[%s387 + $0x128] sm:$0xff]
        %v713 = vld [vmem:[%s387 + $0x130] sm:$0xff]
        %v714 = vld [vmem:[%s387 + $0x138] sm:$0xff]
        %v715 = vld [vmem:[%s387 + $0x140] sm:$0xff]
        %v716 = vld [vmem:[%s387 + $0x148] sm:$0xff]
        %v717 = vld [vmem:[%s387 + $0x150] sm:$0xff]
        %v718 = vld [vmem:[%s387 + $0x158] sm:$0xff]
        %v719 = vld [vmem:[%s387 + $0x160] sm:$0xff]
        %v720 = vld [vmem:[%s387 + $0x168] sm:$0xff]
        %v721 = vld [vmem:[%s387 + $0x170] sm:$0xff]
        %v722 = vld [vmem:[%s387 + $0x178] sm:$0xff]
        %v723 = vld [vmem:[%s387 + $0x180] sm:$0xff]
        %v724 = vld [vmem:[%s387 + $0x188] sm:$0xff]
        %v725 = vld [vmem:[%s387 + $0x190] sm:$0xff]
        %v726 = vld [vmem:[%s387 + $0x198] sm:$0xff]
        %v727 = vld [vmem:[%s387 + $0x1a0] sm:$0xff]
        %v728 = vld [vmem:[%s387 + $0x1a8] sm:$0xff]
        %v729 = vld [vmem:[%s387 + $0x1b0] sm:$0xff]
        %v730 = vld [vmem:[%s387 + $0x1b8] sm:$0xff]
        %v731 = vld [vmem:[%s387 + $0x1c0] sm:$0xff]
        %v732 = vld [vmem:[%s387 + $0x1c8] sm:$0xff]
        %v733 = vld [vmem:[%s387 + $0x1d0] sm:$0xff]
        %v734 = vld [vmem:[%s387 + $0x1d8] sm:$0xff]
        %v735 = vld [vmem:[%s387 + $0x1e0] sm:$0xff]
        %v736 = vld [vmem:[%s387 + $0x1e8] sm:$0xff]
        %v737 = vld [vmem:[%s387 + $0x1f0] sm:$0xff]
        %v738 = vld [vmem:[%s387 + $0x1f8] sm:$0xff]
        %v739 = vld [vmem:[%s387 + $0x200] sm:$0xff]
        %v740 = vld [vmem:[%s387 + $0x208] sm:$0xff]
        %v741 = vld [vmem:[%s387 + $0x210] sm:$0xff]
        %v742 = vld [vmem:[%s387 + $0x218] sm:$0xff]
        %v743 = vld [vmem:[%s387 + $0x220] sm:$0xff]
        %v744 = vld [vmem:[%s387 + $0x228] sm:$0xff]
        %v745 = vld [vmem:[%s387 + $0x230] sm:$0xff]
        %v746 = vld [vmem:[%s387 + $0x238] sm:$0xff]
        %v747 = vld [vmem:[%s387 + $0x240] sm:$0xff]
        %v748 = vld [vmem:[%s387 + $0x248] sm:$0xff]
        %v749 = vld [vmem:[%s387 + $0x250] sm:$0xff]
        %v750 = vld [vmem:[%s387 + $0x258] sm:$0xff]
        %v751 = vld [vmem:[%s387 + $0x260] sm:$0xff]
        %v752 = vld [vmem:[%s387 + $0x268] sm:$0xff]
        %v753 = vld [vmem:[%s387 + $0x270] sm:$0xff]
        %v754 = vld [vmem:[%s387 + $0x278] sm:$0xff]
        %v755 = vld [vmem:[%s387 + $0x280] sm:$0xff]
        %v756 = vld [vmem:[%s387 + $0x288] sm:$0xff]
        %v757 = vld [vmem:[%s387 + $0x290] sm:$0xff]
        %v758 = vld [vmem:[%s387 + $0x298] sm:$0xff]
        %v759 = vld [vmem:[%s387 + $0x2a0] sm:$0xff]
        %v760 = vld [vmem:[%s387 + $0x2a8] sm:$0xff]
        %v761 = vld [vmem:[%s387 + $0x2b0] sm:$0xff]
        %v762 = vld [vmem:[%s387 + $0x2b8] sm:$0xff]
        %v763 = vld [vmem:[%s387 + $0x2c0] sm:$0xff]
        %v764 = vld [vmem:[%s387 + $0x2c8] sm:$0xff]
        %v765 = vld [vmem:[%s387 + $0x2d0] sm:$0xff]
        %v766 = vld [vmem:[%s387 + $0x2d8] sm:$0xff]
        %v767 = vld [vmem:[%s387 + $0x2e0] sm:$0xff]
        %v768 = vld [vmem:[%s387 + $0x2e8] sm:$0xff]
        %v769 = vld [vmem:[%s387 + $0x2f0] sm:$0xff]
        %v770 = vld [vmem:[%s387 + $0x2f8] sm:$0xff]
        %v771 = vld [vmem:[%s387 + $0x300] sm:$0xff]
        %v772 = vld [vmem:[%s387 + $0x308] sm:$0xff]
        %v773 = vld [vmem:[%s387 + $0x310] sm:$0xff]
        %v774 = vld [vmem:[%s387 + $0x318] sm:$0xff]
        %v775 = vld [vmem:[%s387 + $0x320] sm:$0xff]
        %v776 = vld [vmem:[%s387 + $0x328] sm:$0xff]
        %v777 = vld [vmem:[%s387 + $0x330] sm:$0xff]
        %v778 = vld [vmem:[%s387 + $0x338] sm:$0xff]
        %v779 = vld [vmem:[%s387 + $0x340] sm:$0xff]
        %v780 = vld [vmem:[%s387 + $0x348] sm:$0xff]
        %v781 = vld [vmem:[%s387 + $0x350] sm:$0xff]
        %v782 = vld [vmem:[%s387 + $0x358] sm:$0xff]
        %v783 = vld [vmem:[%s387 + $0x360] sm:$0xff]
        %v784 = vld [vmem:[%s387 + $0x368] sm:$0xff]
        %v785 = vld [vmem:[%s387 + $0x370] sm:$0xff]
        %v786 = vld [vmem:[%s387 + $0x378] sm:$0xff]
        %v787 = vld [vmem:[%s387 + $0x380] sm:$0xff]
        %v788 = vld [vmem:[%s387 + $0x388] sm:$0xff]
        %v789 = vld [vmem:[%s387 + $0x390] sm:$0xff]
        %v790 = vld [vmem:[%s387 + $0x398] sm:$0xff]
        %v791 = vld [vmem:[%s387 + $0x3a0] sm:$0xff]
        %v792 = vld [vmem:[%s387 + $0x3a8] sm:$0xff]
        %v793 = vld [vmem:[%s387 + $0x3b0] sm:$0xff]
        %v794 = vld [vmem:[%s387 + $0x3b8] sm:$0xff]
        %v795 = vld [vmem:[%s387 + $0x3c0] sm:$0xff]
        %v796 = vld [vmem:[%s387 + $0x3c8] sm:$0xff]
        %v797 = vld [vmem:[%s387 + $0x3d0] sm:$0xff]
        %v798 = vld [vmem:[%s387 + $0x3d8] sm:$0xff]
        %v799 = vld [vmem:[%s387 + $0x3e0] sm:$0xff]
        %v800 = vld [vmem:[%s387 + $0x3e8] sm:$0xff]
        %v801 = vld [vmem:[%s387 + $0x3f0] sm:$0xff]
        %v802 = vld [vmem:[%s387 + $0x3f8] sm:$0xff]
        %v803 = vld [vmem:[%s387 + $0x400] sm:$0xff]
        %v804 = vld [vmem:[%s387 + $0x408] sm:$0xff]
        %v805 = vld [vmem:[%s387 + $0x410] sm:$0xff]
        %v806 = vld [vmem:[%s387 + $0x418] sm:$0xff]
        %v807 = vld [vmem:[%s387 + $0x420] sm:$0xff]
        %v808 = vld [vmem:[%s387 + $0x428] sm:$0xff]
        %v809 = vld [vmem:[%s387 + $0x430] sm:$0xff]
        %v810 = vld [vmem:[%s387 + $0x438] sm:$0xff]
        %v811 = vld [vmem:[%s387 + $0x440] sm:$0xff]
        %v812 = vld [vmem:[%s387 + $0x448] sm:$0xff]
        %v813 = vld [vmem:[%s387 + $0x450] sm:$0xff]
        %v814 = vld [vmem:[%s387 + $0x458] sm:$0xff]
        %v815 = vld [vmem:[%s387 + $0x460] sm:$0xff]
        %v816 = vld [vmem:[%s387 + $0x468] sm:$0xff]
        %v817 = vld [vmem:[%s387 + $0x470] sm:$0xff]
        %v818 = vld [vmem:[%s387 + $0x478] sm:$0xff]
        %v819 = vld [vmem:[%s387 + $0x480] sm:$0xff]
        %v820 = vld [vmem:[%s387 + $0x488] sm:$0xff]
        %v821 = vld [vmem:[%s387 + $0x490] sm:$0xff]
        %v822 = vld [vmem:[%s387 + $0x498] sm:$0xff]
        %v823 = vld [vmem:[%s387 + $0x4a0] sm:$0xff]
        %v824 = vld [vmem:[%s387 + $0x4a8] sm:$0xff]
        %v825 = vld [vmem:[%s387 + $0x4b0] sm:$0xff]
        %v826 = vld [vmem:[%s387 + $0x4b8] sm:$0xff]
        %v827 = vld [vmem:[%s387 + $0x4c0] sm:$0xff]
        %v828 = vld [vmem:[%s387 + $0x4c8] sm:$0xff]
        %v829 = vld [vmem:[%s387 + $0x4d0] sm:$0xff]
        %v830 = vld [vmem:[%s387 + $0x4d8] sm:$0xff]
        %v831 = vld [vmem:[%s387 + $0x4e0] sm:$0xff]
        %v832 = vld [vmem:[%s387 + $0x4e8] sm:$0xff]
        %v833 = vld [vmem:[%s387 + $0x4f0] sm:$0xff]
        %v834 = vld [vmem:[%s387 + $0x4f8] sm:$0xff]
        %v835 = vld [vmem:[%s387 + $0x500] sm:$0xff]
        %v836 = vld [vmem:[%s387 + $0x508] sm:$0xff]
        %v837 = vld [vmem:[%s387 + $0x510] sm:$0xff]
        %v838 = vld [vmem:[%s387 + $0x518] sm:$0xff]
        %v839 = vld [vmem:[%s387 + $0x520] sm:$0xff]
        %v840 = vld [vmem:[%s387 + $0x528] sm:$0xff]
        %v841 = vld [vmem:[%s387 + $0x530] sm:$0xff]
        %v842 = vld [vmem:[%s387 + $0x538] sm:$0xff]
        %v843 = vld [vmem:[%s387 + $0x540] sm:$0xff]
        %v844 = vld [vmem:[%s387 + $0x548] sm:$0xff]
        %v845 = vld [vmem:[%s387 + $0x550] sm:$0xff]
        %v846 = vld [vmem:[%s387 + $0x558] sm:$0xff]
        %v847 = vld [vmem:[%s387 + $0x560] sm:$0xff]
        %v848 = vld [vmem:[%s387 + $0x568] sm:$0xff]
        %v849 = vld [vmem:[%s387 + $0x570] sm:$0xff]
        %v850 = vld [vmem:[%s387 + $0x578] sm:$0xff]
        %v851 = vld [vmem:[%s387 + $0x580] sm:$0xff]
        %v852 = vld [vmem:[%s387 + $0x588] sm:$0xff]
        %v853 = vld [vmem:[%s387 + $0x590] sm:$0xff]
        %v854 = vld [vmem:[%s387 + $0x598] sm:$0xff]
        %v855 = vld [vmem:[%s387 + $0x5a0] sm:$0xff]
        %v856 = vld [vmem:[%s387 + $0x5a8] sm:$0xff]
        %v857 = vld [vmem:[%s387 + $0x5b0] sm:$0xff]
        %v858 = vld [vmem:[%s387 + $0x5b8] sm:$0xff]
        %v859 = vld [vmem:[%s387 + $0x5c0] sm:$0xff]
        %v860 = vld [vmem:[%s387 + $0x5c8] sm:$0xff]
        %v861 = vld [vmem:[%s387 + $0x5d0] sm:$0xff]
        %v862 = vld [vmem:[%s387 + $0x5d8] sm:$0xff]
        %v863 = vld [vmem:[%s387 + $0x5e0] sm:$0xff]
        %v864 = vld [vmem:[%s387 + $0x5e8] sm:$0xff]
        %v865 = vld [vmem:[%s387 + $0x5f0] sm:$0xff]
        %v866 = vld [vmem:[%s387 + $0x5f8] sm:$0xff]
        %v867 = vld [vmem:[%s387 + $0x600] sm:$0xff]
        %v868 = vld [vmem:[%s387 + $0x608] sm:$0xff]
        %v869 = vld [vmem:[%s387 + $0x610] sm:$0xff]
        %v870 = vld [vmem:[%s387 + $0x618] sm:$0xff]
        %v871 = vld [vmem:[%s387 + $0x620] sm:$0xff]
        %v872 = vld [vmem:[%s387 + $0x628] sm:$0xff]
        %v873 = vld [vmem:[%s387 + $0x630] sm:$0xff]
        %v874 = vld [vmem:[%s387 + $0x638] sm:$0xff]
        %v875 = vld [vmem:[%s387 + $0x640] sm:$0xff]
        %v876 = vld [vmem:[%s387 + $0x648] sm:$0xff]
        %v877 = vld [vmem:[%s387 + $0x650] sm:$0xff]
        %v878 = vld [vmem:[%s387 + $0x658] sm:$0xff]
        %v879 = vld [vmem:[%s387 + $0x660] sm:$0xff]
        %v880 = vld [vmem:[%s387 + $0x668] sm:$0xff]
        %v881 = vld [vmem:[%s387 + $0x670] sm:$0xff]
        %v882 = vld [vmem:[%s387 + $0x678] sm:$0xff]
        %v883 = vld [vmem:[%s387 + $0x680] sm:$0xff]
        %v884 = vld [vmem:[%s387 + $0x688] sm:$0xff]
        %v885 = vld [vmem:[%s387 + $0x690] sm:$0xff]
        %v886 = vld [vmem:[%s387 + $0x698] sm:$0xff]
        %v887 = vld [vmem:[%s387 + $0x6a0] sm:$0xff]
        %v888 = vld [vmem:[%s387 + $0x6a8] sm:$0xff]
        %v889 = vld [vmem:[%s387 + $0x6b0] sm:$0xff]
        %v890 = vld [vmem:[%s387 + $0x6b8] sm:$0xff]
        %v891 = vld [vmem:[%s387 + $0x6c0] sm:$0xff]
        %v892 = vld [vmem:[%s387 + $0x6c8] sm:$0xff]
        %v893 = vld [vmem:[%s387 + $0x6d0] sm:$0xff]
        %v894 = vld [vmem:[%s387 + $0x6d8] sm:$0xff]
        %v895 = vld [vmem:[%s387 + $0x6e0] sm:$0xff]
        %v896 = vld [vmem:[%s387 + $0x6e8] sm:$0xff]
        %v897 = vld [vmem:[%s387 + $0x6f0] sm:$0xff]
        %v898 = vld [vmem:[%s387 + $0x6f8] sm:$0xff]
        %v899 = vld [vmem:[%s387 + $0x700] sm:$0xff]
        %v900 = vld [vmem:[%s387 + $0x708] sm:$0xff]
        %v901 = vld [vmem:[%s387 + $0x710] sm:$0xff]
        %v902 = vld [vmem:[%s387 + $0x718] sm:$0xff]
        %v903 = vld [vmem:[%s387 + $0x720] sm:$0xff]
        %v904 = vld [vmem:[%s387 + $0x728] sm:$0xff]
        %v905 = vld [vmem:[%s387 + $0x730] sm:$0xff]
        %v906 = vld [vmem:[%s387 + $0x738] sm:$0xff]
        %v907 = vld [vmem:[%s387 + $0x740] sm:$0xff]
        %v908 = vld [vmem:[%s387 + $0x748] sm:$0xff]
        %v909 = vld [vmem:[%s387 + $0x750] sm:$0xff]
        %v910 = vld [vmem:[%s387 + $0x758] sm:$0xff]
        %v911 = vld [vmem:[%s387 + $0x760] sm:$0xff]
        %v912 = vld [vmem:[%s387 + $0x768] sm:$0xff]
        %v913 = vld [vmem:[%s387 + $0x770] sm:$0xff]
        %v914 = vld [vmem:[%s387 + $0x778] sm:$0xff]
        %v915 = vld [vmem:[%s387 + $0x780] sm:$0xff]
        %v916 = vld [vmem:[%s387 + $0x788] sm:$0xff]
        %v917 = vld [vmem:[%s387 + $0x790] sm:$0xff]
        %v918 = vld [vmem:[%s387 + $0x798] sm:$0xff]
        %v919 = vld [vmem:[%s387 + $0x7a0] sm:$0xff]
        %v920 = vld [vmem:[%s387 + $0x7a8] sm:$0xff]
        %v921 = vld [vmem:[%s387 + $0x7b0] sm:$0xff]
        %v922 = vld [vmem:[%s387 + $0x7b8] sm:$0xff]
        %v923 = vld [vmem:[%s387 + $0x7c0] sm:$0xff]
        %v924 = vld [vmem:[%s387 + $0x7c8] sm:$0xff]
        %v925 = vld [vmem:[%s387 + $0x7d0] sm:$0xff]
        %v926 = vld [vmem:[%s387 + $0x7d8] sm:$0xff]
        %v927 = vld [vmem:[%s387 + $0x7e0] sm:$0xff]
        %v928 = vld [vmem:[%s387 + $0x7e8] sm:$0xff]
        %v929 = vld [vmem:[%s387 + $0x7f0] sm:$0xff]
        %v930 = vld [vmem:[%s387 + $0x7f8] sm:$0xff]
        %v931 = vld [vmem:[%s397] sm:$0xf]
        %v933 = vperm.slane %v931, 0
        %v934 = vperm.slane %v931, 1
        %v935 = vperm.slane %v931, 2
        %v936 = vperm.slane %v931, 3
        %v945 = vunpack.c.l.b16 %v671
        %v946 = vunpack.c.h.b16 %v671
        %v947 = vunpack.c.l.b16 %v672
        %v948 = vunpack.c.h.b16 %v672
        %v949 = vunpack.c.l.b16 %v673
        %v950 = vunpack.c.h.b16 %v673
        %v951 = vunpack.c.l.b16 %v674
        %v952 = vunpack.c.h.b16 %v674
        %v953 = vpack.c.b16 %v945, %v945
        %v954 = vpack.c.b16 %v946, %v946
        %v955 = vpack.c.b16 %v947, %v947
        %v956 = vpack.c.b16 %v948, %v948
        %v957 = vpack.c.b16 %v949, %v949
        %v958 = vpack.c.b16 %v950, %v950
        %v959 = vpack.c.b16 %v951, %v951
        %v960 = vpack.c.b16 %v952, %v952
        %v1225 = vunpack.c.l.b16 %v675
        %v1226 = vunpack.c.h.b16 %v675
        %v1227 = vunpack.c.l.b16 %v676
        %v1228 = vunpack.c.h.b16 %v676
        %v1229 = vunpack.c.l.b16 %v677
        %v1230 = vunpack.c.h.b16 %v677
        %v1231 = vunpack.c.l.b16 %v678
        %v1232 = vunpack.c.h.b16 %v678
        %v1233 = vunpack.c.l.b16 %v679
        %v1234 = vunpack.c.h.b16 %v679
        %v1235 = vunpack.c.l.b16 %v680
        %v1236 = vunpack.c.h.b16 %v680
        %v1237 = vunpack.c.l.b16 %v681
        %v1238 = vunpack.c.h.b16 %v681
        %v1239 = vunpack.c.l.b16 %v682
        %v1240 = vunpack.c.h.b16 %v682
        %v1241 = vunpack.c.l.b16 %v683
        %v1242 = vunpack.c.h.b16 %v683
        %v1243 = vunpack.c.l.b16 %v684
        %v1244 = vunpack.c.h.b16 %v684
        %v1245 = vunpack.c.l.b16 %v685
        %v1246 = vunpack.c.h.b16 %v685
        %v1247 = vunpack.c.l.b16 %v686
        %v1248 = vunpack.c.h.b16 %v686
        %v1249 = vunpack.c.l.b16 %v687
        %v1250 = vunpack.c.h.b16 %v687
        %v1251 = vunpack.c.l.b16 %v688
        %v1252 = vunpack.c.h.b16 %v688
        %v1253 = vunpack.c.l.b16 %v689
        %v1254 = vunpack.c.h.b16 %v689
        %v1255 = vunpack.c.l.b16 %v690
        %v1256 = vunpack.c.h.b16 %v690
        %v1257 = vunpack.c.l.b16 %v691
        %v1258 = vunpack.c.h.b16 %v691
        %v1259 = vunpack.c.l.b16 %v692
        %v1260 = vunpack.c.h.b16 %v692
        %v1261 = vunpack.c.l.b16 %v693
        %v1262 = vunpack.c.h.b16 %v693
        %v1263 = vunpack.c.l.b16 %v694
        %v1264 = vunpack.c.h.b16 %v694
        %v1265 = vunpack.c.l.b16 %v695
        %v1266 = vunpack.c.h.b16 %v695
        %v1267 = vunpack.c.l.b16 %v696
        %v1268 = vunpack.c.h.b16 %v696
        %v1269 = vunpack.c.l.b16 %v697
        %v1270 = vunpack.c.h.b16 %v697
        %v1271 = vunpack.c.l.b16 %v698
        %v1272 = vunpack.c.h.b16 %v698
        %v1273 = vunpack.c.l.b16 %v699
        %v1274 = vunpack.c.h.b16 %v699
        %v1275 = vunpack.c.l.b16 %v700
        %v1276 = vunpack.c.h.b16 %v700
        %v1277 = vunpack.c.l.b16 %v701
        %v1278 = vunpack.c.h.b16 %v701
        %v1279 = vunpack.c.l.b16 %v702
        %v1280 = vunpack.c.h.b16 %v702
        %v1281 = vunpack.c.l.b16 %v703
        %v1282 = vunpack.c.h.b16 %v703
        %v1283 = vunpack.c.l.b16 %v704
        %v1284 = vunpack.c.h.b16 %v704
        %v1285 = vunpack.c.l.b16 %v705
        %v1286 = vunpack.c.h.b16 %v705
        %v1287 = vunpack.c.l.b16 %v706
        %v1288 = vunpack.c.h.b16 %v706
        %v1289 = vunpack.c.l.b16 %v707
        %v1290 = vunpack.c.h.b16 %v707
        %v1291 = vunpack.c.l.b16 %v708
        %v1292 = vunpack.c.h.b16 %v708
        %v1293 = vunpack.c.l.b16 %v709
        %v1294 = vunpack.c.h.b16 %v709
        %v1295 = vunpack.c.l.b16 %v710
        %v1296 = vunpack.c.h.b16 %v710
        %v1297 = vunpack.c.l.b16 %v711
        %v1298 = vunpack.c.h.b16 %v711
        %v1299 = vunpack.c.l.b16 %v712
        %v1300 = vunpack.c.h.b16 %v712
        %v1301 = vunpack.c.l.b16 %v713
        %v1302 = vunpack.c.h.b16 %v713
        %v1303 = vunpack.c.l.b16 %v714
        %v1304 = vunpack.c.h.b16 %v714
        %v1305 = vunpack.c.l.b16 %v715
        %v1306 = vunpack.c.h.b16 %v715
        %v1307 = vunpack.c.l.b16 %v716
        %v1308 = vunpack.c.h.b16 %v716
        %v1309 = vunpack.c.l.b16 %v717
        %v1310 = vunpack.c.h.b16 %v717
        %v1311 = vunpack.c.l.b16 %v718
        %v1312 = vunpack.c.h.b16 %v718
        %v1313 = vunpack.c.l.b16 %v719
        %v1314 = vunpack.c.h.b16 %v719
        %v1315 = vunpack.c.l.b16 %v720
        %v1316 = vunpack.c.h.b16 %v720
        %v1317 = vunpack.c.l.b16 %v721
        %v1318 = vunpack.c.h.b16 %v721
        %v1319 = vunpack.c.l.b16 %v722
        %v1320 = vunpack.c.h.b16 %v722
        %v1321 = vunpack.c.l.b16 %v723
        %v1322 = vunpack.c.h.b16 %v723
        %v1323 = vunpack.c.l.b16 %v724
        %v1324 = vunpack.c.h.b16 %v724
        %v1325 = vunpack.c.l.b16 %v725
        %v1326 = vunpack.c.h.b16 %v725
        %v1327 = vunpack.c.l.b16 %v726
        %v1328 = vunpack.c.h.b16 %v726
        %v1329 = vunpack.c.l.b16 %v727
        %v1330 = vunpack.c.h.b16 %v727
        %v1331 = vunpack.c.l.b16 %v728
        %v1332 = vunpack.c.h.b16 %v728
        %v1333 = vunpack.c.l.b16 %v729
        %v1334 = vunpack.c.h.b16 %v729
        %v1335 = vunpack.c.l.b16 %v730
        %v1336 = vunpack.c.h.b16 %v730
        %v1337 = vunpack.c.l.b16 %v731
        %v1338 = vunpack.c.h.b16 %v731
        %v1339 = vunpack.c.l.b16 %v732
        %v1340 = vunpack.c.h.b16 %v732
        %v1341 = vunpack.c.l.b16 %v733
        %v1342 = vunpack.c.h.b16 %v733
        %v1343 = vunpack.c.l.b16 %v734
        %v1344 = vunpack.c.h.b16 %v734
        %v1345 = vunpack.c.l.b16 %v735
        %v1346 = vunpack.c.h.b16 %v735
        %v1347 = vunpack.c.l.b16 %v736
        %v1348 = vunpack.c.h.b16 %v736
        %v1349 = vunpack.c.l.b16 %v737
        %v1350 = vunpack.c.h.b16 %v737
        %v1351 = vunpack.c.l.b16 %v738
        %v1352 = vunpack.c.h.b16 %v738
        %v1353 = vunpack.c.l.b16 %v739
        %v1354 = vunpack.c.h.b16 %v739
        %v1355 = vunpack.c.l.b16 %v740
        %v1356 = vunpack.c.h.b16 %v740
        %v1357 = vunpack.c.l.b16 %v741
        %v1358 = vunpack.c.h.b16 %v741
        %v1359 = vunpack.c.l.b16 %v742
        %v1360 = vunpack.c.h.b16 %v742
        %v1361 = vunpack.c.l.b16 %v743
        %v1362 = vunpack.c.h.b16 %v743
        %v1363 = vunpack.c.l.b16 %v744
        %v1364 = vunpack.c.h.b16 %v744
        %v1365 = vunpack.c.l.b16 %v745
        %v1366 = vunpack.c.h.b16 %v745
        %v1367 = vunpack.c.l.b16 %v746
        %v1368 = vunpack.c.h.b16 %v746
        %v1369 = vunpack.c.l.b16 %v747
        %v1370 = vunpack.c.h.b16 %v747
        %v1371 = vunpack.c.l.b16 %v748
        %v1372 = vunpack.c.h.b16 %v748
        %v1373 = vunpack.c.l.b16 %v749
        %v1374 = vunpack.c.h.b16 %v749
        %v1375 = vunpack.c.l.b16 %v750
        %v1376 = vunpack.c.h.b16 %v750
        %v1377 = vunpack.c.l.b16 %v751
        %v1378 = vunpack.c.h.b16 %v751
        %v1379 = vunpack.c.l.b16 %v752
        %v1380 = vunpack.c.h.b16 %v752
        %v1381 = vunpack.c.l.b16 %v753
        %v1382 = vunpack.c.h.b16 %v753
        %v1383 = vunpack.c.l.b16 %v754
        %v1384 = vunpack.c.h.b16 %v754
        %v1385 = vunpack.c.l.b16 %v755
        %v1386 = vunpack.c.h.b16 %v755
        %v1387 = vunpack.c.l.b16 %v756
        %v1388 = vunpack.c.h.b16 %v756
        %v1389 = vunpack.c.l.b16 %v757
        %v1390 = vunpack.c.h.b16 %v757
        %v1391 = vunpack.c.l.b16 %v758
        %v1392 = vunpack.c.h.b16 %v758
        %v1393 = vunpack.c.l.b16 %v759
        %v1394 = vunpack.c.h.b16 %v759
        %v1395 = vunpack.c.l.b16 %v760
        %v1396 = vunpack.c.h.b16 %v760
        %v1397 = vunpack.c.l.b16 %v761
        %v1398 = vunpack.c.h.b16 %v761
        %v1399 = vunpack.c.l.b16 %v762
        %v1400 = vunpack.c.h.b16 %v762
        %v1401 = vunpack.c.l.b16 %v763
        %v1402 = vunpack.c.h.b16 %v763
        %v1403 = vunpack.c.l.b16 %v764
        %v1404 = vunpack.c.h.b16 %v764
        %v1405 = vunpack.c.l.b16 %v765
        %v1406 = vunpack.c.h.b16 %v765
        %v1407 = vunpack.c.l.b16 %v766
        %v1408 = vunpack.c.h.b16 %v766
        %v1409 = vunpack.c.l.b16 %v767
        %v1410 = vunpack.c.h.b16 %v767
        %v1411 = vunpack.c.l.b16 %v768
        %v1412 = vunpack.c.h.b16 %v768
        %v1413 = vunpack.c.l.b16 %v769
        %v1414 = vunpack.c.h.b16 %v769
        %v1415 = vunpack.c.l.b16 %v770
        %v1416 = vunpack.c.h.b16 %v770
        %v1417 = vunpack.c.l.b16 %v771
        %v1418 = vunpack.c.h.b16 %v771
        %v1419 = vunpack.c.l.b16 %v772
        %v1420 = vunpack.c.h.b16 %v772
        %v1421 = vunpack.c.l.b16 %v773
        %v1422 = vunpack.c.h.b16 %v773
        %v1423 = vunpack.c.l.b16 %v774
        %v1424 = vunpack.c.h.b16 %v774
        %v1425 = vunpack.c.l.b16 %v775
        %v1426 = vunpack.c.h.b16 %v775
        %v1427 = vunpack.c.l.b16 %v776
        %v1428 = vunpack.c.h.b16 %v776
        %v1429 = vunpack.c.l.b16 %v777
        %v1430 = vunpack.c.h.b16 %v777
        %v1431 = vunpack.c.l.b16 %v778
        %v1432 = vunpack.c.h.b16 %v778
        %v1433 = vunpack.c.l.b16 %v779
        %v1434 = vunpack.c.h.b16 %v779
        %v1435 = vunpack.c.l.b16 %v780
        %v1436 = vunpack.c.h.b16 %v780
        %v1437 = vunpack.c.l.b16 %v781
        %v1438 = vunpack.c.h.b16 %v781
        %v1439 = vunpack.c.l.b16 %v782
        %v1440 = vunpack.c.h.b16 %v782
        %v1441 = vunpack.c.l.b16 %v783
        %v1442 = vunpack.c.h.b16 %v783
        %v1443 = vunpack.c.l.b16 %v784
        %v1444 = vunpack.c.h.b16 %v784
        %v1445 = vunpack.c.l.b16 %v785
        %v1446 = vunpack.c.h.b16 %v785
        %v1447 = vunpack.c.l.b16 %v786
        %v1448 = vunpack.c.h.b16 %v786
        %v1449 = vunpack.c.l.b16 %v787
        %v1450 = vunpack.c.h.b16 %v787
        %v1451 = vunpack.c.l.b16 %v788
        %v1452 = vunpack.c.h.b16 %v788
        %v1453 = vunpack.c.l.b16 %v789
        %v1454 = vunpack.c.h.b16 %v789
        %v1455 = vunpack.c.l.b16 %v790
        %v1456 = vunpack.c.h.b16 %v790
        %v1457 = vunpack.c.l.b16 %v791
        %v1458 = vunpack.c.h.b16 %v791
        %v1459 = vunpack.c.l.b16 %v792
        %v1460 = vunpack.c.h.b16 %v792
        %v1461 = vunpack.c.l.b16 %v793
        %v1462 = vunpack.c.h.b16 %v793
        %v1463 = vunpack.c.l.b16 %v794
        %v1464 = vunpack.c.h.b16 %v794
        %v1465 = vunpack.c.l.b16 %v795
        %v1466 = vunpack.c.h.b16 %v795
        %v1467 = vunpack.c.l.b16 %v796
        %v1468 = vunpack.c.h.b16 %v796
        %v1469 = vunpack.c.l.b16 %v797
        %v1470 = vunpack.c.h.b16 %v797
        %v1471 = vunpack.c.l.b16 %v798
        %v1472 = vunpack.c.h.b16 %v798
        %v1473 = vunpack.c.l.b16 %v799
        %v1474 = vunpack.c.h.b16 %v799
        %v1475 = vunpack.c.l.b16 %v800
        %v1476 = vunpack.c.h.b16 %v800
        %v1477 = vunpack.c.l.b16 %v801
        %v1478 = vunpack.c.h.b16 %v801
        %v1479 = vunpack.c.l.b16 %v802
        %v1480 = vunpack.c.h.b16 %v802
        %v1481 = vunpack.c.l.b16 %v803
        %v1482 = vunpack.c.h.b16 %v803
        %v1483 = vunpack.c.l.b16 %v804
        %v1484 = vunpack.c.h.b16 %v804
        %v1485 = vunpack.c.l.b16 %v805
        %v1486 = vunpack.c.h.b16 %v805
        %v1487 = vunpack.c.l.b16 %v806
        %v1488 = vunpack.c.h.b16 %v806
        %v1489 = vunpack.c.l.b16 %v807
        %v1490 = vunpack.c.h.b16 %v807
        %v1491 = vunpack.c.l.b16 %v808
        %v1492 = vunpack.c.h.b16 %v808
        %v1493 = vunpack.c.l.b16 %v809
        %v1494 = vunpack.c.h.b16 %v809
        %v1495 = vunpack.c.l.b16 %v810
        %v1496 = vunpack.c.h.b16 %v810
        %v1497 = vunpack.c.l.b16 %v811
        %v1498 = vunpack.c.h.b16 %v811
        %v1499 = vunpack.c.l.b16 %v812
        %v1500 = vunpack.c.h.b16 %v812
        %v1501 = vunpack.c.l.b16 %v813
        %v1502 = vunpack.c.h.b16 %v813
        %v1503 = vunpack.c.l.b16 %v814
        %v1504 = vunpack.c.h.b16 %v814
        %v1505 = vunpack.c.l.b16 %v815
        %v1506 = vunpack.c.h.b16 %v815
        %v1507 = vunpack.c.l.b16 %v816
        %v1508 = vunpack.c.h.b16 %v816
        %v1509 = vunpack.c.l.b16 %v817
        %v1510 = vunpack.c.h.b16 %v817
        %v1511 = vunpack.c.l.b16 %v818
        %v1512 = vunpack.c.h.b16 %v818
        %v1513 = vunpack.c.l.b16 %v819
        %v1514 = vunpack.c.h.b16 %v819
        %v1515 = vunpack.c.l.b16 %v820
        %v1516 = vunpack.c.h.b16 %v820
        %v1517 = vunpack.c.l.b16 %v821
        %v1518 = vunpack.c.h.b16 %v821
        %v1519 = vunpack.c.l.b16 %v822
        %v1520 = vunpack.c.h.b16 %v822
        %v1521 = vunpack.c.l.b16 %v823
        %v1522 = vunpack.c.h.b16 %v823
        %v1523 = vunpack.c.l.b16 %v824
        %v1524 = vunpack.c.h.b16 %v824
        %v1525 = vunpack.c.l.b16 %v825
        %v1526 = vunpack.c.h.b16 %v825
        %v1527 = vunpack.c.l.b16 %v826
        %v1528 = vunpack.c.h.b16 %v826
        %v1529 = vunpack.c.l.b16 %v827
        %v1530 = vunpack.c.h.b16 %v827
        %v1531 = vunpack.c.l.b16 %v828
        %v1532 = vunpack.c.h.b16 %v828
        %v1533 = vunpack.c.l.b16 %v829
        %v1534 = vunpack.c.h.b16 %v829
        %v1535 = vunpack.c.l.b16 %v830
        %v1536 = vunpack.c.h.b16 %v830
        %v1537 = vunpack.c.l.b16 %v831
        %v1538 = vunpack.c.h.b16 %v831
        %v1539 = vunpack.c.l.b16 %v832
        %v1540 = vunpack.c.h.b16 %v832
        %v1541 = vunpack.c.l.b16 %v833
        %v1542 = vunpack.c.h.b16 %v833
        %v1543 = vunpack.c.l.b16 %v834
        %v1544 = vunpack.c.h.b16 %v834
        %v1545 = vunpack.c.l.b16 %v835
        %v1546 = vunpack.c.h.b16 %v835
        %v1547 = vunpack.c.l.b16 %v836
        %v1548 = vunpack.c.h.b16 %v836
        %v1549 = vunpack.c.l.b16 %v837
        %v1550 = vunpack.c.h.b16 %v837
        %v1551 = vunpack.c.l.b16 %v838
        %v1552 = vunpack.c.h.b16 %v838
        %v1553 = vunpack.c.l.b16 %v839
        %v1554 = vunpack.c.h.b16 %v839
        %v1555 = vunpack.c.l.b16 %v840
        %v1556 = vunpack.c.h.b16 %v840
        %v1557 = vunpack.c.l.b16 %v841
        %v1558 = vunpack.c.h.b16 %v841
        %v1559 = vunpack.c.l.b16 %v842
        %v1560 = vunpack.c.h.b16 %v842
        %v1561 = vunpack.c.l.b16 %v843
        %v1562 = vunpack.c.h.b16 %v843
        %v1563 = vunpack.c.l.b16 %v844
        %v1564 = vunpack.c.h.b16 %v844
        %v1565 = vunpack.c.l.b16 %v845
        %v1566 = vunpack.c.h.b16 %v845
        %v1567 = vunpack.c.l.b16 %v846
        %v1568 = vunpack.c.h.b16 %v846
        %v1569 = vunpack.c.l.b16 %v847
        %v1570 = vunpack.c.h.b16 %v847
        %v1571 = vunpack.c.l.b16 %v848
        %v1572 = vunpack.c.h.b16 %v848
        %v1573 = vunpack.c.l.b16 %v849
        %v1574 = vunpack.c.h.b16 %v849
        %v1575 = vunpack.c.l.b16 %v850
        %v1576 = vunpack.c.h.b16 %v850
        %v1577 = vunpack.c.l.b16 %v851
        %v1578 = vunpack.c.h.b16 %v851
        %v1579 = vunpack.c.l.b16 %v852
        %v1580 = vunpack.c.h.b16 %v852
        %v1581 = vunpack.c.l.b16 %v853
        %v1582 = vunpack.c.h.b16 %v853
        %v1583 = vunpack.c.l.b16 %v854
        %v1584 = vunpack.c.h.b16 %v854
        %v1585 = vunpack.c.l.b16 %v855
        %v1586 = vunpack.c.h.b16 %v855
        %v1587 = vunpack.c.l.b16 %v856
        %v1588 = vunpack.c.h.b16 %v856
        %v1589 = vunpack.c.l.b16 %v857
        %v1590 = vunpack.c.h.b16 %v857
        %v1591 = vunpack.c.l.b16 %v858
        %v1592 = vunpack.c.h.b16 %v858
        %v1593 = vunpack.c.l.b16 %v859
        %v1594 = vunpack.c.h.b16 %v859
        %v1595 = vunpack.c.l.b16 %v860
        %v1596 = vunpack.c.h.b16 %v860
        %v1597 = vunpack.c.l.b16 %v861
        %v1598 = vunpack.c.h.b16 %v861
        %v1599 = vunpack.c.l.b16 %v862
        %v1600 = vunpack.c.h.b16 %v862
        %v1601 = vunpack.c.l.b16 %v863
        %v1602 = vunpack.c.h.b16 %v863
        %v1603 = vunpack.c.l.b16 %v864
        %v1604 = vunpack.c.h.b16 %v864
        %v1605 = vunpack.c.l.b16 %v865
        %v1606 = vunpack.c.h.b16 %v865
        %v1607 = vunpack.c.l.b16 %v866
        %v1608 = vunpack.c.h.b16 %v866
        %v1609 = vunpack.c.l.b16 %v867
        %v1610 = vunpack.c.h.b16 %v867
        %v1611 = vunpack.c.l.b16 %v868
        %v1612 = vunpack.c.h.b16 %v868
        %v1613 = vunpack.c.l.b16 %v869
        %v1614 = vunpack.c.h.b16 %v869
        %v1615 = vunpack.c.l.b16 %v870
        %v1616 = vunpack.c.h.b16 %v870
        %v1617 = vunpack.c.l.b16 %v871
        %v1618 = vunpack.c.h.b16 %v871
        %v1619 = vunpack.c.l.b16 %v872
        %v1620 = vunpack.c.h.b16 %v872
        %v1621 = vunpack.c.l.b16 %v873
        %v1622 = vunpack.c.h.b16 %v873
        %v1623 = vunpack.c.l.b16 %v874
        %v1624 = vunpack.c.h.b16 %v874
        %v1625 = vunpack.c.l.b16 %v875
        %v1626 = vunpack.c.h.b16 %v875
        %v1627 = vunpack.c.l.b16 %v876
        %v1628 = vunpack.c.h.b16 %v876
        %v1629 = vunpack.c.l.b16 %v877
        %v1630 = vunpack.c.h.b16 %v877
        %v1631 = vunpack.c.l.b16 %v878
        %v1632 = vunpack.c.h.b16 %v878
        %v1633 = vunpack.c.l.b16 %v879
        %v1634 = vunpack.c.h.b16 %v879
        %v1635 = vunpack.c.l.b16 %v880
        %v1636 = vunpack.c.h.b16 %v880
        %v1637 = vunpack.c.l.b16 %v881
        %v1638 = vunpack.c.h.b16 %v881
        %v1639 = vunpack.c.l.b16 %v882
        %v1640 = vunpack.c.h.b16 %v882
        %v1641 = vunpack.c.l.b16 %v883
        %v1642 = vunpack.c.h.b16 %v883
        %v1643 = vunpack.c.l.b16 %v884
        %v1644 = vunpack.c.h.b16 %v884
        %v1645 = vunpack.c.l.b16 %v885
        %v1646 = vunpack.c.h.b16 %v885
        %v1647 = vunpack.c.l.b16 %v886
        %v1648 = vunpack.c.h.b16 %v886
        %v1649 = vunpack.c.l.b16 %v887
        %v1650 = vunpack.c.h.b16 %v887
        %v1651 = vunpack.c.l.b16 %v888
        %v1652 = vunpack.c.h.b16 %v888
        %v1653 = vunpack.c.l.b16 %v889
        %v1654 = vunpack.c.h.b16 %v889
        %v1655 = vunpack.c.l.b16 %v890
        %v1656 = vunpack.c.h.b16 %v890
        %v1657 = vunpack.c.l.b16 %v891
        %v1658 = vunpack.c.h.b16 %v891
        %v1659 = vunpack.c.l.b16 %v892
        %v1660 = vunpack.c.h.b16 %v892
        %v1661 = vunpack.c.l.b16 %v893
        %v1662 = vunpack.c.h.b16 %v893
        %v1663 = vunpack.c.l.b16 %v894
        %v1664 = vunpack.c.h.b16 %v894
        %v1665 = vunpack.c.l.b16 %v895
        %v1666 = vunpack.c.h.b16 %v895
        %v1667 = vunpack.c.l.b16 %v896
        %v1668 = vunpack.c.h.b16 %v896
        %v1669 = vunpack.c.l.b16 %v897
        %v1670 = vunpack.c.h.b16 %v897
        %v1671 = vunpack.c.l.b16 %v898
        %v1672 = vunpack.c.h.b16 %v898
        %v1673 = vunpack.c.l.b16 %v899
        %v1674 = vunpack.c.h.b16 %v899
        %v1675 = vunpack.c.l.b16 %v900
        %v1676 = vunpack.c.h.b16 %v900
        %v1677 = vunpack.c.l.b16 %v901
        %v1678 = vunpack.c.h.b16 %v901
        %v1679 = vunpack.c.l.b16 %v902
        %v1680 = vunpack.c.h.b16 %v902
        %v1681 = vunpack.c.l.b16 %v903
        %v1682 = vunpack.c.h.b16 %v903
        %v1683 = vunpack.c.l.b16 %v904
        %v1684 = vunpack.c.h.b16 %v904
        %v1685 = vunpack.c.l.b16 %v905
        %v1686 = vunpack.c.h.b16 %v905
        %v1687 = vunpack.c.l.b16 %v906
        %v1688 = vunpack.c.h.b16 %v906
        %v1689 = vunpack.c.l.b16 %v907
        %v1690 = vunpack.c.h.b16 %v907
        %v1691 = vunpack.c.l.b16 %v908
        %v1692 = vunpack.c.h.b16 %v908
        %v1693 = vunpack.c.l.b16 %v909
        %v1694 = vunpack.c.h.b16 %v909
        %v1695 = vunpack.c.l.b16 %v910
        %v1696 = vunpack.c.h.b16 %v910
        %v1697 = vunpack.c.l.b16 %v911
        %v1698 = vunpack.c.h.b16 %v911
        %v1699 = vunpack.c.l.b16 %v912
        %v1700 = vunpack.c.h.b16 %v912
        %v1701 = vunpack.c.l.b16 %v913
        %v1702 = vunpack.c.h.b16 %v913
        %v1703 = vunpack.c.l.b16 %v914
        %v1704 = vunpack.c.h.b16 %v914
        %v1705 = vunpack.c.l.b16 %v915
        %v1706 = vunpack.c.h.b16 %v915
        %v1707 = vunpack.c.l.b16 %v916
        %v1708 = vunpack.c.h.b16 %v916
        %v1709 = vunpack.c.l.b16 %v917
        %v1710 = vunpack.c.h.b16 %v917
        %v1711 = vunpack.c.l.b16 %v918
        %v1712 = vunpack.c.h.b16 %v918
        %v1713 = vunpack.c.l.b16 %v919
        %v1714 = vunpack.c.h.b16 %v919
        %v1715 = vunpack.c.l.b16 %v920
        %v1716 = vunpack.c.h.b16 %v920
        %v1717 = vunpack.c.l.b16 %v921
        %v1718 = vunpack.c.h.b16 %v921
        %v1719 = vunpack.c.l.b16 %v922
        %v1720 = vunpack.c.h.b16 %v922
        %v1721 = vunpack.c.l.b16 %v923
        %v1722 = vunpack.c.h.b16 %v923
        %v1723 = vunpack.c.l.b16 %v924
        %v1724 = vunpack.c.h.b16 %v924
        %v1725 = vunpack.c.l.b16 %v925
        %v1726 = vunpack.c.h.b16 %v925
        %v1727 = vunpack.c.l.b16 %v926
        %v1728 = vunpack.c.h.b16 %v926
        %v1729 = vunpack.c.l.b16 %v927
        %v1730 = vunpack.c.h.b16 %v927
        %v1731 = vunpack.c.l.b16 %v928
        %v1732 = vunpack.c.h.b16 %v928
        %v1733 = vunpack.c.l.b16 %v929
        %v1734 = vunpack.c.h.b16 %v929
        %v1735 = vunpack.c.l.b16 %v930
        %v1736 = vunpack.c.h.b16 %v930
        %v1737 = vpack.c.b16 %v1229, %v1225
        %v1738 = vpack.c.b16 %v1230, %v1226
        %v1739 = vpack.c.b16 %v1231, %v1227
        %v1740 = vpack.c.b16 %v1232, %v1228
        %v1741 = vpack.c.b16 %v1237, %v1233
        %v1742 = vpack.c.b16 %v1238, %v1234
        %v1743 = vpack.c.b16 %v1239, %v1235
        %v1744 = vpack.c.b16 %v1240, %v1236
        %v1745 = vpack.c.b16 %v1245, %v1241
        %v1746 = vpack.c.b16 %v1246, %v1242
        %v1747 = vpack.c.b16 %v1247, %v1243
        %v1748 = vpack.c.b16 %v1248, %v1244
        %v1749 = vpack.c.b16 %v1253, %v1249
        %v1750 = vpack.c.b16 %v1254, %v1250
        %v1751 = vpack.c.b16 %v1255, %v1251
        %v1752 = vpack.c.b16 %v1256, %v1252
        %v1753 = vpack.c.b16 %v1261, %v1257
        %v1754 = vpack.c.b16 %v1262, %v1258
        %v1755 = vpack.c.b16 %v1263, %v1259
        %v1756 = vpack.c.b16 %v1264, %v1260
        %v1757 = vpack.c.b16 %v1269, %v1265
        %v1758 = vpack.c.b16 %v1270, %v1266
        %v1759 = vpack.c.b16 %v1271, %v1267
        %v1760 = vpack.c.b16 %v1272, %v1268
        %v1761 = vpack.c.b16 %v1277, %v1273
        %v1762 = vpack.c.b16 %v1278, %v1274
        %v1763 = vpack.c.b16 %v1279, %v1275
        %v1764 = vpack.c.b16 %v1280, %v1276
        %v1765 = vpack.c.b16 %v1285, %v1281
        %v1766 = vpack.c.b16 %v1286, %v1282
        %v1767 = vpack.c.b16 %v1287, %v1283
        %v1768 = vpack.c.b16 %v1288, %v1284
        %v1769 = vpack.c.b16 %v1293, %v1289
        %v1770 = vpack.c.b16 %v1294, %v1290
        %v1771 = vpack.c.b16 %v1295, %v1291
        %v1772 = vpack.c.b16 %v1296, %v1292
        %v1773 = vpack.c.b16 %v1301, %v1297
        %v1774 = vpack.c.b16 %v1302, %v1298
        %v1775 = vpack.c.b16 %v1303, %v1299
        %v1776 = vpack.c.b16 %v1304, %v1300
        %v1777 = vpack.c.b16 %v1309, %v1305
        %v1778 = vpack.c.b16 %v1310, %v1306
        %v1779 = vpack.c.b16 %v1311, %v1307
        %v1780 = vpack.c.b16 %v1312, %v1308
        %v1781 = vpack.c.b16 %v1317, %v1313
        %v1782 = vpack.c.b16 %v1318, %v1314
        %v1783 = vpack.c.b16 %v1319, %v1315
        %v1784 = vpack.c.b16 %v1320, %v1316
        %v1785 = vpack.c.b16 %v1325, %v1321
        %v1786 = vpack.c.b16 %v1326, %v1322
        %v1787 = vpack.c.b16 %v1327, %v1323
        %v1788 = vpack.c.b16 %v1328, %v1324
        %v1789 = vpack.c.b16 %v1333, %v1329
        %v1790 = vpack.c.b16 %v1334, %v1330
        %v1791 = vpack.c.b16 %v1335, %v1331
        %v1792 = vpack.c.b16 %v1336, %v1332
        %v1793 = vpack.c.b16 %v1341, %v1337
        %v1794 = vpack.c.b16 %v1342, %v1338
        %v1795 = vpack.c.b16 %v1343, %v1339
        %v1796 = vpack.c.b16 %v1344, %v1340
        %v1797 = vpack.c.b16 %v1349, %v1345
        %v1798 = vpack.c.b16 %v1350, %v1346
        %v1799 = vpack.c.b16 %v1351, %v1347
        %v1800 = vpack.c.b16 %v1352, %v1348
        %v1801 = vpack.c.b16 %v1357, %v1353
        %v1802 = vpack.c.b16 %v1358, %v1354
        %v1803 = vpack.c.b16 %v1359, %v1355
        %v1804 = vpack.c.b16 %v1360, %v1356
        %v1805 = vpack.c.b16 %v1365, %v1361
        %v1806 = vpack.c.b16 %v1366, %v1362
        %v1807 = vpack.c.b16 %v1367, %v1363
        %v1808 = vpack.c.b16 %v1368, %v1364
        %v1809 = vpack.c.b16 %v1373, %v1369
        %v1810 = vpack.c.b16 %v1374, %v1370
        %v1811 = vpack.c.b16 %v1375, %v1371
        %v1812 = vpack.c.b16 %v1376, %v1372
        %v1813 = vpack.c.b16 %v1381, %v1377
        %v1814 = vpack.c.b16 %v1382, %v1378
        %v1815 = vpack.c.b16 %v1383, %v1379
        %v1816 = vpack.c.b16 %v1384, %v1380
        %v1817 = vpack.c.b16 %v1389, %v1385
        %v1818 = vpack.c.b16 %v1390, %v1386
        %v1819 = vpack.c.b16 %v1391, %v1387
        %v1820 = vpack.c.b16 %v1392, %v1388
        %v1821 = vpack.c.b16 %v1397, %v1393
        %v1822 = vpack.c.b16 %v1398, %v1394
        %v1823 = vpack.c.b16 %v1399, %v1395
        %v1824 = vpack.c.b16 %v1400, %v1396
        %v1825 = vpack.c.b16 %v1405, %v1401
        %v1826 = vpack.c.b16 %v1406, %v1402
        %v1827 = vpack.c.b16 %v1407, %v1403
        %v1828 = vpack.c.b16 %v1408, %v1404
        %v1829 = vpack.c.b16 %v1413, %v1409
        %v1830 = vpack.c.b16 %v1414, %v1410
        %v1831 = vpack.c.b16 %v1415, %v1411
        %v1832 = vpack.c.b16 %v1416, %v1412
        %v1833 = vpack.c.b16 %v1421, %v1417
        %v1834 = vpack.c.b16 %v1422, %v1418
        %v1835 = vpack.c.b16 %v1423, %v1419
        %v1836 = vpack.c.b16 %v1424, %v1420
        %v1837 = vpack.c.b16 %v1429, %v1425
        %v1838 = vpack.c.b16 %v1430, %v1426
        %v1839 = vpack.c.b16 %v1431, %v1427
        %v1840 = vpack.c.b16 %v1432, %v1428
        %v1841 = vpack.c.b16 %v1437, %v1433
        %v1842 = vpack.c.b16 %v1438, %v1434
        %v1843 = vpack.c.b16 %v1439, %v1435
        %v1844 = vpack.c.b16 %v1440, %v1436
        %v1845 = vpack.c.b16 %v1445, %v1441
        %v1846 = vpack.c.b16 %v1446, %v1442
        %v1847 = vpack.c.b16 %v1447, %v1443
        %v1848 = vpack.c.b16 %v1448, %v1444
        %v1849 = vpack.c.b16 %v1453, %v1449
        %v1850 = vpack.c.b16 %v1454, %v1450
        %v1851 = vpack.c.b16 %v1455, %v1451
        %v1852 = vpack.c.b16 %v1456, %v1452
        %v1853 = vpack.c.b16 %v1461, %v1457
        %v1854 = vpack.c.b16 %v1462, %v1458
        %v1855 = vpack.c.b16 %v1463, %v1459
        %v1856 = vpack.c.b16 %v1464, %v1460
        %v1857 = vpack.c.b16 %v1469, %v1465
        %v1858 = vpack.c.b16 %v1470, %v1466
        %v1859 = vpack.c.b16 %v1471, %v1467
        %v1860 = vpack.c.b16 %v1472, %v1468
        %v1861 = vpack.c.b16 %v1477, %v1473
        %v1862 = vpack.c.b16 %v1478, %v1474
        %v1863 = vpack.c.b16 %v1479, %v1475
        %v1864 = vpack.c.b16 %v1480, %v1476
        %v1865 = vpack.c.b16 %v1485, %v1481
        %v1866 = vpack.c.b16 %v1486, %v1482
        %v1867 = vpack.c.b16 %v1487, %v1483
        %v1868 = vpack.c.b16 %v1488, %v1484
        %v1869 = vpack.c.b16 %v1493, %v1489
        %v1870 = vpack.c.b16 %v1494, %v1490
        %v1871 = vpack.c.b16 %v1495, %v1491
        %v1872 = vpack.c.b16 %v1496, %v1492
        %v1873 = vpack.c.b16 %v1501, %v1497
        %v1874 = vpack.c.b16 %v1502, %v1498
        %v1875 = vpack.c.b16 %v1503, %v1499
        %v1876 = vpack.c.b16 %v1504, %v1500
        %v1877 = vpack.c.b16 %v1509, %v1505
        %v1878 = vpack.c.b16 %v1510, %v1506
        %v1879 = vpack.c.b16 %v1511, %v1507
        %v1880 = vpack.c.b16 %v1512, %v1508
        %v1881 = vpack.c.b16 %v1517, %v1513
        %v1882 = vpack.c.b16 %v1518, %v1514
        %v1883 = vpack.c.b16 %v1519, %v1515
        %v1884 = vpack.c.b16 %v1520, %v1516
        %v1885 = vpack.c.b16 %v1525, %v1521
        %v1886 = vpack.c.b16 %v1526, %v1522
        %v1887 = vpack.c.b16 %v1527, %v1523
        %v1888 = vpack.c.b16 %v1528, %v1524
        %v1889 = vpack.c.b16 %v1533, %v1529
        %v1890 = vpack.c.b16 %v1534, %v1530
        %v1891 = vpack.c.b16 %v1535, %v1531
        %v1892 = vpack.c.b16 %v1536, %v1532
        %v1893 = vpack.c.b16 %v1541, %v1537
        %v1894 = vpack.c.b16 %v1542, %v1538
        %v1895 = vpack.c.b16 %v1543, %v1539
        %v1896 = vpack.c.b16 %v1544, %v1540
        %v1897 = vpack.c.b16 %v1549, %v1545
        %v1898 = vpack.c.b16 %v1550, %v1546
        %v1899 = vpack.c.b16 %v1551, %v1547
        %v1900 = vpack.c.b16 %v1552, %v1548
        %v1901 = vpack.c.b16 %v1557, %v1553
        %v1902 = vpack.c.b16 %v1558, %v1554
        %v1903 = vpack.c.b16 %v1559, %v1555
        %v1904 = vpack.c.b16 %v1560, %v1556
        %v1905 = vpack.c.b16 %v1565, %v1561
        %v1906 = vpack.c.b16 %v1566, %v1562
        %v1907 = vpack.c.b16 %v1567, %v1563
        %v1908 = vpack.c.b16 %v1568, %v1564
        %v1909 = vpack.c.b16 %v1573, %v1569
        %v1910 = vpack.c.b16 %v1574, %v1570
        %v1911 = vpack.c.b16 %v1575, %v1571
        %v1912 = vpack.c.b16 %v1576, %v1572
        %v1913 = vpack.c.b16 %v1581, %v1577
        %v1914 = vpack.c.b16 %v1582, %v1578
        %v1915 = vpack.c.b16 %v1583, %v1579
        %v1916 = vpack.c.b16 %v1584, %v1580
        %v1917 = vpack.c.b16 %v1589, %v1585
        %v1918 = vpack.c.b16 %v1590, %v1586
        %v1919 = vpack.c.b16 %v1591, %v1587
        %v1920 = vpack.c.b16 %v1592, %v1588
        %v1921 = vpack.c.b16 %v1597, %v1593
        %v1922 = vpack.c.b16 %v1598, %v1594
        %v1923 = vpack.c.b16 %v1599, %v1595
        %v1924 = vpack.c.b16 %v1600, %v1596
        %v1925 = vpack.c.b16 %v1605, %v1601
        %v1926 = vpack.c.b16 %v1606, %v1602
        %v1927 = vpack.c.b16 %v1607, %v1603
        %v1928 = vpack.c.b16 %v1608, %v1604
        %v1929 = vpack.c.b16 %v1613, %v1609
        %v1930 = vpack.c.b16 %v1614, %v1610
        %v1931 = vpack.c.b16 %v1615, %v1611
        %v1932 = vpack.c.b16 %v1616, %v1612
        %v1933 = vpack.c.b16 %v1621, %v1617
        %v1934 = vpack.c.b16 %v1622, %v1618
        %v1935 = vpack.c.b16 %v1623, %v1619
        %v1936 = vpack.c.b16 %v1624, %v1620
        %v1937 = vpack.c.b16 %v1629, %v1625
        %v1938 = vpack.c.b16 %v1630, %v1626
        %v1939 = vpack.c.b16 %v1631, %v1627
        %v1940 = vpack.c.b16 %v1632, %v1628
        %v1941 = vpack.c.b16 %v1637, %v1633
        %v1942 = vpack.c.b16 %v1638, %v1634
        %v1943 = vpack.c.b16 %v1639, %v1635
        %v1944 = vpack.c.b16 %v1640, %v1636
        %v1945 = vpack.c.b16 %v1645, %v1641
        %v1946 = vpack.c.b16 %v1646, %v1642
        %v1947 = vpack.c.b16 %v1647, %v1643
        %v1948 = vpack.c.b16 %v1648, %v1644
        %v1949 = vpack.c.b16 %v1653, %v1649
        %v1950 = vpack.c.b16 %v1654, %v1650
        %v1951 = vpack.c.b16 %v1655, %v1651
        %v1952 = vpack.c.b16 %v1656, %v1652
        %v1953 = vpack.c.b16 %v1661, %v1657
        %v1954 = vpack.c.b16 %v1662, %v1658
        %v1955 = vpack.c.b16 %v1663, %v1659
        %v1956 = vpack.c.b16 %v1664, %v1660
        %v1957 = vpack.c.b16 %v1669, %v1665
        %v1958 = vpack.c.b16 %v1670, %v1666
        %v1959 = vpack.c.b16 %v1671, %v1667
        %v1960 = vpack.c.b16 %v1672, %v1668
        %v1961 = vpack.c.b16 %v1677, %v1673
        %v1962 = vpack.c.b16 %v1678, %v1674
        %v1963 = vpack.c.b16 %v1679, %v1675
        %v1964 = vpack.c.b16 %v1680, %v1676
        %v1965 = vpack.c.b16 %v1685, %v1681
        %v1966 = vpack.c.b16 %v1686, %v1682
        %v1967 = vpack.c.b16 %v1687, %v1683
        %v1968 = vpack.c.b16 %v1688, %v1684
        %v1969 = vpack.c.b16 %v1693, %v1689
        %v1970 = vpack.c.b16 %v1694, %v1690
        %v1971 = vpack.c.b16 %v1695, %v1691
        %v1972 = vpack.c.b16 %v1696, %v1692
        %v1973 = vpack.c.b16 %v1701, %v1697
        %v1974 = vpack.c.b16 %v1702, %v1698
        %v1975 = vpack.c.b16 %v1703, %v1699
        %v1976 = vpack.c.b16 %v1704, %v1700
        %v1977 = vpack.c.b16 %v1709, %v1705
        %v1978 = vpack.c.b16 %v1710, %v1706
        %v1979 = vpack.c.b16 %v1711, %v1707
        %v1980 = vpack.c.b16 %v1712, %v1708
        %v1981 = vpack.c.b16 %v1717, %v1713
        %v1982 = vpack.c.b16 %v1718, %v1714
        %v1983 = vpack.c.b16 %v1719, %v1715
        %v1984 = vpack.c.b16 %v1720, %v1716
        %v1985 = vpack.c.b16 %v1725, %v1721
        %v1986 = vpack.c.b16 %v1726, %v1722
        %v1987 = vpack.c.b16 %v1727, %v1723
        %v1988 = vpack.c.b16 %v1728, %v1724
        %v1989 = vpack.c.b16 %v1733, %v1729
        %v1990 = vpack.c.b16 %v1734, %v1730
        %v1991 = vpack.c.b16 %v1735, %v1731
        %v1992 = vpack.c.b16 %v1736, %v1732
        %2249 = vmatpush.bf16.msra.mxu0 %v1765
        %2250 = vmatpush.bf16.msra.mxu0 %v1761
        %2251 = vmatpush.bf16.msra.mxu0 %v1757
        %2252 = vmatpush.bf16.msra.mxu0 %v1753
        %2253 = vmatpush.bf16.msra.mxu0 %v1749
        %2254 = vmatpush.bf16.msra.mxu0 %v1745
        %2255 = vmatpush.bf16.msra.mxu0 %v1741
        %2256 = vmatpush.bf16.msra.mxu0 %v1737
        %2257 = vmatmul.bf16.gmra.mxu0 %v953
        %v2258 = vpop.f32.mrf.mxu0
        %v2259 = vadd.f32 %v933, %v2258
        %v2260 = vpop.f32.mrf.mxu0
        %2261 = vdwg.mxu0
        %2262 = vmatpush.bf16.msra.mxu0 %v1797
        %2263 = vmatpush.bf16.msra.mxu0 %v1793
        %2264 = vmatpush.bf16.msra.mxu0 %v1789
        %2265 = vmatpush.bf16.msra.mxu0 %v1785
        %2266 = vmatpush.bf16.msra.mxu0 %v1781
        %2267 = vmatpush.bf16.msra.mxu0 %v1777
        %2268 = vmatpush.bf16.msra.mxu0 %v1773
        %2269 = vmatpush.bf16.msra.mxu0 %v1769
        %2270 = vmatmul.bf16.gmra.mxu0 %v954
        %v2271 = vpop.f32.mrf.mxu0
        %v2272 = vadd.f32 %v2259, %v2271
        %v2273 = vpop.f32.mrf.mxu0
        %2274 = vdwg.mxu0
        %2275 = vmatpush.bf16.msra.mxu0 %v1829
        %2276 = vmatpush.bf16.msra.mxu0 %v1825
        %2277 = vmatpush.bf16.msra.mxu0 %v1821
        %2278 = vmatpush.bf16.msra.mxu0 %v1817
        %2279 = vmatpush.bf16.msra.mxu0 %v1813
        %2280 = vmatpush.bf16.msra.mxu0 %v1809
        %2281 = vmatpush.bf16.msra.mxu0 %v1805
        %2282 = vmatpush.bf16.msra.mxu0 %v1801
        %2283 = vmatmul.bf16.gmra.mxu0 %v955
        %v2284 = vpop.f32.mrf.mxu0
        %v2285 = vadd.f32 %v2272, %v2284
        %v2286 = vpop.f32.mrf.mxu0
        %2287 = vdwg.mxu0
        %2288 = vmatpush.bf16.msra.mxu0 %v1861
        %2289 = vmatpush.bf16.msra.mxu0 %v1857
        %2290 = vmatpush.bf16.msra.mxu0 %v1853
        %2291 = vmatpush.bf16.msra.mxu0 %v1849
        %2292 = vmatpush.bf16.msra.mxu0 %v1845
        %2293 = vmatpush.bf16.msra.mxu0 %v1841
        %2294 = vmatpush.bf16.msra.mxu0 %v1837
        %2295 = vmatpush.bf16.msra.mxu0 %v1833
        %2296 = vmatmul.bf16.gmra.mxu0 %v956
        %v2297 = vpop.f32.mrf.mxu0
        %v2298 = vadd.f32 %v2285, %v2297
        %v2299 = vpop.f32.mrf.mxu0
        %2300 = vdwg.mxu0
        %2301 = vmatpush.bf16.msra.mxu0 %v1893
        %2302 = vmatpush.bf16.msra.mxu0 %v1889
        %2303 = vmatpush.bf16.msra.mxu0 %v1885
        %2304 = vmatpush.bf16.msra.mxu0 %v1881
        %2305 = vmatpush.bf16.msra.mxu0 %v1877
        %2306 = vmatpush.bf16.msra.mxu0 %v1873
        %2307 = vmatpush.bf16.msra.mxu0 %v1869
        %2308 = vmatpush.bf16.msra.mxu0 %v1865
        %2309 = vmatmul.bf16.gmra.mxu0 %v957
        %v2310 = vpop.f32.mrf.mxu0
        %v2311 = vadd.f32 %v2298, %v2310
        %v2312 = vpop.f32.mrf.mxu0
        %2313 = vdwg.mxu0
        %2314 = vmatpush.bf16.msra.mxu0 %v1925
        %2315 = vmatpush.bf16.msra.mxu0 %v1921
        %2316 = vmatpush.bf16.msra.mxu0 %v1917
        %2317 = vmatpush.bf16.msra.mxu0 %v1913
        %2318 = vmatpush.bf16.msra.mxu0 %v1909
        %2319 = vmatpush.bf16.msra.mxu0 %v1905
        %2320 = vmatpush.bf16.msra.mxu0 %v1901
        %2321 = vmatpush.bf16.msra.mxu0 %v1897
        %2322 = vmatmul.bf16.gmra.mxu0 %v958
        %v2323 = vpop.f32.mrf.mxu0
        %v2324 = vadd.f32 %v2311, %v2323
        %v2325 = vpop.f32.mrf.mxu0
        %2326 = vdwg.mxu0
        %2327 = vmatpush.bf16.msra.mxu0 %v1957
        %2328 = vmatpush.bf16.msra.mxu0 %v1953
        %2329 = vmatpush.bf16.msra.mxu0 %v1949
        %2330 = vmatpush.bf16.msra.mxu0 %v1945
        %2331 = vmatpush.bf16.msra.mxu0 %v1941
        %2332 = vmatpush.bf16.msra.mxu0 %v1937
        %2333 = vmatpush.bf16.msra.mxu0 %v1933
        %2334 = vmatpush.bf16.msra.mxu0 %v1929
        %2335 = vmatmul.bf16.gmra.mxu0 %v959
        %v2336 = vpop.f32.mrf.mxu0
        %v2337 = vadd.f32 %v2324, %v2336
        %v2338 = vpop.f32.mrf.mxu0
        %2339 = vdwg.mxu0
        %2340 = vmatpush.bf16.msra.mxu0 %v1989
        %2341 = vmatpush.bf16.msra.mxu0 %v1985
        %2342 = vmatpush.bf16.msra.mxu0 %v1981
        %2343 = vmatpush.bf16.msra.mxu0 %v1977
        %2344 = vmatpush.bf16.msra.mxu0 %v1973
        %2345 = vmatpush.bf16.msra.mxu0 %v1969
        %2346 = vmatpush.bf16.msra.mxu0 %v1965
        %2347 = vmatpush.bf16.msra.mxu0 %v1961
        %2348 = vmatmul.bf16.gmra.mxu0 %v960
        %v2349 = vpop.f32.mrf.mxu0
        %v2350 = vadd.f32 %v2337, %v2349
        %v2351 = vpop.f32.mrf.mxu0
        %2352 = vdwg.mxu0
        %2353 = vmatpush.bf16.msra.mxu0 %v1766
        %2354 = vmatpush.bf16.msra.mxu0 %v1762
        %2355 = vmatpush.bf16.msra.mxu0 %v1758
        %2356 = vmatpush.bf16.msra.mxu0 %v1754
        %2357 = vmatpush.bf16.msra.mxu0 %v1750
        %2358 = vmatpush.bf16.msra.mxu0 %v1746
        %2359 = vmatpush.bf16.msra.mxu0 %v1742
        %2360 = vmatpush.bf16.msra.mxu0 %v1738
        %2361 = vmatmul.bf16.gmra.mxu0 %v953
        %v2362 = vpop.f32.mrf.mxu0
        %v2363 = vadd.f32 %v934, %v2362
        %v2364 = vpop.f32.mrf.mxu0
        %2365 = vdwg.mxu0
        %2366 = vmatpush.bf16.msra.mxu0 %v1798
        %2367 = vmatpush.bf16.msra.mxu0 %v1794
        %2368 = vmatpush.bf16.msra.mxu0 %v1790
        %2369 = vmatpush.bf16.msra.mxu0 %v1786
        %2370 = vmatpush.bf16.msra.mxu0 %v1782
        %2371 = vmatpush.bf16.msra.mxu0 %v1778
        %2372 = vmatpush.bf16.msra.mxu0 %v1774
        %2373 = vmatpush.bf16.msra.mxu0 %v1770
        %2374 = vmatmul.bf16.gmra.mxu0 %v954
        %v2375 = vpop.f32.mrf.mxu0
        %v2376 = vadd.f32 %v2363, %v2375
        %v2377 = vpop.f32.mrf.mxu0
        %2378 = vdwg.mxu0
        %2379 = vmatpush.bf16.msra.mxu0 %v1830
        %2380 = vmatpush.bf16.msra.mxu0 %v1826
        %2381 = vmatpush.bf16.msra.mxu0 %v1822
        %2382 = vmatpush.bf16.msra.mxu0 %v1818
        %2383 = vmatpush.bf16.msra.mxu0 %v1814
        %2384 = vmatpush.bf16.msra.mxu0 %v1810
        %2385 = vmatpush.bf16.msra.mxu0 %v1806
        %2386 = vmatpush.bf16.msra.mxu0 %v1802
        %2387 = vmatmul.bf16.gmra.mxu0 %v955
        %v2388 = vpop.f32.mrf.mxu0
        %v2389 = vadd.f32 %v2376, %v2388
        %v2390 = vpop.f32.mrf.mxu0
        %2391 = vdwg.mxu0
        %2392 = vmatpush.bf16.msra.mxu0 %v1862
        %2393 = vmatpush.bf16.msra.mxu0 %v1858
        %2394 = vmatpush.bf16.msra.mxu0 %v1854
        %2395 = vmatpush.bf16.msra.mxu0 %v1850
        %2396 = vmatpush.bf16.msra.mxu0 %v1846
        %2397 = vmatpush.bf16.msra.mxu0 %v1842
        %2398 = vmatpush.bf16.msra.mxu0 %v1838
        %2399 = vmatpush.bf16.msra.mxu0 %v1834
        %2400 = vmatmul.bf16.gmra.mxu0 %v956
        %v2401 = vpop.f32.mrf.mxu0
        %v2402 = vadd.f32 %v2389, %v2401
        %v2403 = vpop.f32.mrf.mxu0
        %2404 = vdwg.mxu0
        %2405 = vmatpush.bf16.msra.mxu0 %v1894
        %2406 = vmatpush.bf16.msra.mxu0 %v1890
        %2407 = vmatpush.bf16.msra.mxu0 %v1886
        %2408 = vmatpush.bf16.msra.mxu0 %v1882
        %2409 = vmatpush.bf16.msra.mxu0 %v1878
        %2410 = vmatpush.bf16.msra.mxu0 %v1874
        %2411 = vmatpush.bf16.msra.mxu0 %v1870
        %2412 = vmatpush.bf16.msra.mxu0 %v1866
        %2413 = vmatmul.bf16.gmra.mxu0 %v957
        %v2414 = vpop.f32.mrf.mxu0
        %v2415 = vadd.f32 %v2402, %v2414
        %v2416 = vpop.f32.mrf.mxu0
        %2417 = vdwg.mxu0
        %2418 = vmatpush.bf16.msra.mxu0 %v1926
        %2419 = vmatpush.bf16.msra.mxu0 %v1922
        %2420 = vmatpush.bf16.msra.mxu0 %v1918
        %2421 = vmatpush.bf16.msra.mxu0 %v1914
        %2422 = vmatpush.bf16.msra.mxu0 %v1910
        %2423 = vmatpush.bf16.msra.mxu0 %v1906
        %2424 = vmatpush.bf16.msra.mxu0 %v1902
        %2425 = vmatpush.bf16.msra.mxu0 %v1898
        %2426 = vmatmul.bf16.gmra.mxu0 %v958
        %v2427 = vpop.f32.mrf.mxu0
        %v2428 = vadd.f32 %v2415, %v2427
        %v2429 = vpop.f32.mrf.mxu0
        %2430 = vdwg.mxu0
        %2431 = vmatpush.bf16.msra.mxu0 %v1958
        %2432 = vmatpush.bf16.msra.mxu0 %v1954
        %2433 = vmatpush.bf16.msra.mxu0 %v1950
        %2434 = vmatpush.bf16.msra.mxu0 %v1946
        %2435 = vmatpush.bf16.msra.mxu0 %v1942
        %2436 = vmatpush.bf16.msra.mxu0 %v1938
        %2437 = vmatpush.bf16.msra.mxu0 %v1934
        %2438 = vmatpush.bf16.msra.mxu0 %v1930
        %2439 = vmatmul.bf16.gmra.mxu0 %v959
        %v2440 = vpop.f32.mrf.mxu0
        %v2441 = vadd.f32 %v2428, %v2440
        %v2442 = vpop.f32.mrf.mxu0
        %2443 = vdwg.mxu0
        %2444 = vmatpush.bf16.msra.mxu0 %v1990
        %2445 = vmatpush.bf16.msra.mxu0 %v1986
        %2446 = vmatpush.bf16.msra.mxu0 %v1982
        %2447 = vmatpush.bf16.msra.mxu0 %v1978
        %2448 = vmatpush.bf16.msra.mxu0 %v1974
        %2449 = vmatpush.bf16.msra.mxu0 %v1970
        %2450 = vmatpush.bf16.msra.mxu0 %v1966
        %2451 = vmatpush.bf16.msra.mxu0 %v1962
        %2452 = vmatmul.bf16.gmra.mxu0 %v960
        %v2453 = vpop.f32.mrf.mxu0
        %v2454 = vadd.f32 %v2441, %v2453
        %v2455 = vpop.f32.mrf.mxu0
        %2456 = vdwg.mxu0
        %2457 = vmatpush.bf16.msra.mxu0 %v1767
        %2458 = vmatpush.bf16.msra.mxu0 %v1763
        %2459 = vmatpush.bf16.msra.mxu0 %v1759
        %2460 = vmatpush.bf16.msra.mxu0 %v1755
        %2461 = vmatpush.bf16.msra.mxu0 %v1751
        %2462 = vmatpush.bf16.msra.mxu0 %v1747
        %2463 = vmatpush.bf16.msra.mxu0 %v1743
        %2464 = vmatpush.bf16.msra.mxu0 %v1739
        %2465 = vmatmul.bf16.gmra.mxu0 %v953
        %v2466 = vpop.f32.mrf.mxu0
        %v2467 = vadd.f32 %v935, %v2466
        %v2468 = vpop.f32.mrf.mxu0
        %2469 = vdwg.mxu0
        %2470 = vmatpush.bf16.msra.mxu0 %v1799
        %2471 = vmatpush.bf16.msra.mxu0 %v1795
        %2472 = vmatpush.bf16.msra.mxu0 %v1791
        %2473 = vmatpush.bf16.msra.mxu0 %v1787
        %2474 = vmatpush.bf16.msra.mxu0 %v1783
        %2475 = vmatpush.bf16.msra.mxu0 %v1779
        %2476 = vmatpush.bf16.msra.mxu0 %v1775
        %2477 = vmatpush.bf16.msra.mxu0 %v1771
        %2478 = vmatmul.bf16.gmra.mxu0 %v954
        %v2479 = vpop.f32.mrf.mxu0
        %v2480 = vadd.f32 %v2467, %v2479
        %v2481 = vpop.f32.mrf.mxu0
        %2482 = vdwg.mxu0
        %2483 = vmatpush.bf16.msra.mxu0 %v1831
        %2484 = vmatpush.bf16.msra.mxu0 %v1827
        %2485 = vmatpush.bf16.msra.mxu0 %v1823
        %2486 = vmatpush.bf16.msra.mxu0 %v1819
        %2487 = vmatpush.bf16.msra.mxu0 %v1815
        %2488 = vmatpush.bf16.msra.mxu0 %v1811
        %2489 = vmatpush.bf16.msra.mxu0 %v1807
        %2490 = vmatpush.bf16.msra.mxu0 %v1803
        %2491 = vmatmul.bf16.gmra.mxu0 %v955
        %v2492 = vpop.f32.mrf.mxu0
        %v2493 = vadd.f32 %v2480, %v2492
        %v2494 = vpop.f32.mrf.mxu0
        %2495 = vdwg.mxu0
        %2496 = vmatpush.bf16.msra.mxu0 %v1863
        %2497 = vmatpush.bf16.msra.mxu0 %v1859
        %2498 = vmatpush.bf16.msra.mxu0 %v1855
        %2499 = vmatpush.bf16.msra.mxu0 %v1851
        %2500 = vmatpush.bf16.msra.mxu0 %v1847
        %2501 = vmatpush.bf16.msra.mxu0 %v1843
        %2502 = vmatpush.bf16.msra.mxu0 %v1839
        %2503 = vmatpush.bf16.msra.mxu0 %v1835
        %2504 = vmatmul.bf16.gmra.mxu0 %v956
        %v2505 = vpop.f32.mrf.mxu0
        %v2506 = vadd.f32 %v2493, %v2505
        %v2507 = vpop.f32.mrf.mxu0
        %2508 = vdwg.mxu0
        %2509 = vmatpush.bf16.msra.mxu0 %v1895
        %2510 = vmatpush.bf16.msra.mxu0 %v1891
        %2511 = vmatpush.bf16.msra.mxu0 %v1887
        %2512 = vmatpush.bf16.msra.mxu0 %v1883
        %2513 = vmatpush.bf16.msra.mxu0 %v1879
        %2514 = vmatpush.bf16.msra.mxu0 %v1875
        %2515 = vmatpush.bf16.msra.mxu0 %v1871
        %2516 = vmatpush.bf16.msra.mxu0 %v1867
        %2517 = vmatmul.bf16.gmra.mxu0 %v957
        %v2518 = vpop.f32.mrf.mxu0
        %v2519 = vadd.f32 %v2506, %v2518
        %v2520 = vpop.f32.mrf.mxu0
        %2521 = vdwg.mxu0
        %2522 = vmatpush.bf16.msra.mxu0 %v1927
        %2523 = vmatpush.bf16.msra.mxu0 %v1923
        %2524 = vmatpush.bf16.msra.mxu0 %v1919
        %2525 = vmatpush.bf16.msra.mxu0 %v1915
        %2526 = vmatpush.bf16.msra.mxu0 %v1911
        %2527 = vmatpush.bf16.msra.mxu0 %v1907
        %2528 = vmatpush.bf16.msra.mxu0 %v1903
        %2529 = vmatpush.bf16.msra.mxu0 %v1899
        %2530 = vmatmul.bf16.gmra.mxu0 %v958
        %v2531 = vpop.f32.mrf.mxu0
        %v2532 = vadd.f32 %v2519, %v2531
        %v2533 = vpop.f32.mrf.mxu0
        %2534 = vdwg.mxu0
        %2535 = vmatpush.bf16.msra.mxu0 %v1959
        %2536 = vmatpush.bf16.msra.mxu0 %v1955
        %2537 = vmatpush.bf16.msra.mxu0 %v1951
        %2538 = vmatpush.bf16.msra.mxu0 %v1947
        %2539 = vmatpush.bf16.msra.mxu0 %v1943
        %2540 = vmatpush.bf16.msra.mxu0 %v1939
        %2541 = vmatpush.bf16.msra.mxu0 %v1935
        %2542 = vmatpush.bf16.msra.mxu0 %v1931
        %2543 = vmatmul.bf16.gmra.mxu0 %v959
        %v2544 = vpop.f32.mrf.mxu0
        %v2545 = vadd.f32 %v2532, %v2544
        %v2546 = vpop.f32.mrf.mxu0
        %2547 = vdwg.mxu0
        %2548 = vmatpush.bf16.msra.mxu0 %v1991
        %2549 = vmatpush.bf16.msra.mxu0 %v1987
        %2550 = vmatpush.bf16.msra.mxu0 %v1983
        %2551 = vmatpush.bf16.msra.mxu0 %v1979
        %2552 = vmatpush.bf16.msra.mxu0 %v1975
        %2553 = vmatpush.bf16.msra.mxu0 %v1971
        %2554 = vmatpush.bf16.msra.mxu0 %v1967
        %2555 = vmatpush.bf16.msra.mxu0 %v1963
        %2556 = vmatmul.bf16.gmra.mxu0 %v960
        %v2557 = vpop.f32.mrf.mxu0
        %v2558 = vadd.f32 %v2545, %v2557
        %v2559 = vpop.f32.mrf.mxu0
        %2560 = vdwg.mxu0
        %2561 = vmatpush.bf16.msra.mxu0 %v1768
        %2562 = vmatpush.bf16.msra.mxu0 %v1764
        %2563 = vmatpush.bf16.msra.mxu0 %v1760
        %2564 = vmatpush.bf16.msra.mxu0 %v1756
        %2565 = vmatpush.bf16.msra.mxu0 %v1752
        %2566 = vmatpush.bf16.msra.mxu0 %v1748
        %2567 = vmatpush.bf16.msra.mxu0 %v1744
        %2568 = vmatpush.bf16.msra.mxu0 %v1740
        %2569 = vmatmul.bf16.gmra.mxu0 %v953
        %v2570 = vpop.f32.mrf.mxu0
        %v2571 = vadd.f32 %v936, %v2570
        %v2572 = vpop.f32.mrf.mxu0
        %2573 = vdwg.mxu0
        %2574 = vmatpush.bf16.msra.mxu0 %v1800
        %2575 = vmatpush.bf16.msra.mxu0 %v1796
        %2576 = vmatpush.bf16.msra.mxu0 %v1792
        %2577 = vmatpush.bf16.msra.mxu0 %v1788
        %2578 = vmatpush.bf16.msra.mxu0 %v1784
        %2579 = vmatpush.bf16.msra.mxu0 %v1780
        %2580 = vmatpush.bf16.msra.mxu0 %v1776
        %2581 = vmatpush.bf16.msra.mxu0 %v1772
        %2582 = vmatmul.bf16.gmra.mxu0 %v954
        %v2583 = vpop.f32.mrf.mxu0
        %v2584 = vadd.f32 %v2571, %v2583
        %v2585 = vpop.f32.mrf.mxu0
        %2586 = vdwg.mxu0
        %2587 = vmatpush.bf16.msra.mxu0 %v1832
        %2588 = vmatpush.bf16.msra.mxu0 %v1828
        %2589 = vmatpush.bf16.msra.mxu0 %v1824
        %2590 = vmatpush.bf16.msra.mxu0 %v1820
        %2591 = vmatpush.bf16.msra.mxu0 %v1816
        %2592 = vmatpush.bf16.msra.mxu0 %v1812
        %2593 = vmatpush.bf16.msra.mxu0 %v1808
        %2594 = vmatpush.bf16.msra.mxu0 %v1804
        %2595 = vmatmul.bf16.gmra.mxu0 %v955
        %v2596 = vpop.f32.mrf.mxu0
        %v2597 = vadd.f32 %v2584, %v2596
        %v2598 = vpop.f32.mrf.mxu0
        %2599 = vdwg.mxu0
        %2600 = vmatpush.bf16.msra.mxu0 %v1864
        %2601 = vmatpush.bf16.msra.mxu0 %v1860
        %2602 = vmatpush.bf16.msra.mxu0 %v1856
        %2603 = vmatpush.bf16.msra.mxu0 %v1852
        %2604 = vmatpush.bf16.msra.mxu0 %v1848
        %2605 = vmatpush.bf16.msra.mxu0 %v1844
        %2606 = vmatpush.bf16.msra.mxu0 %v1840
        %2607 = vmatpush.bf16.msra.mxu0 %v1836
        %2608 = vmatmul.bf16.gmra.mxu0 %v956
        %v2609 = vpop.f32.mrf.mxu0
        %v2610 = vadd.f32 %v2597, %v2609
        %v2611 = vpop.f32.mrf.mxu0
        %2612 = vdwg.mxu0
        %2613 = vmatpush.bf16.msra.mxu0 %v1896
        %2614 = vmatpush.bf16.msra.mxu0 %v1892
        %2615 = vmatpush.bf16.msra.mxu0 %v1888
        %2616 = vmatpush.bf16.msra.mxu0 %v1884
        %2617 = vmatpush.bf16.msra.mxu0 %v1880
        %2618 = vmatpush.bf16.msra.mxu0 %v1876
        %2619 = vmatpush.bf16.msra.mxu0 %v1872
        %2620 = vmatpush.bf16.msra.mxu0 %v1868
        %2621 = vmatmul.bf16.gmra.mxu0 %v957
        %v2622 = vpop.f32.mrf.mxu0
        %v2623 = vadd.f32 %v2610, %v2622
        %v2624 = vpop.f32.mrf.mxu0
        %2625 = vdwg.mxu0
        %2626 = vmatpush.bf16.msra.mxu0 %v1928
        %2627 = vmatpush.bf16.msra.mxu0 %v1924
        %2628 = vmatpush.bf16.msra.mxu0 %v1920
        %2629 = vmatpush.bf16.msra.mxu0 %v1916
        %2630 = vmatpush.bf16.msra.mxu0 %v1912
        %2631 = vmatpush.bf16.msra.mxu0 %v1908
        %2632 = vmatpush.bf16.msra.mxu0 %v1904
        %2633 = vmatpush.bf16.msra.mxu0 %v1900
        %2634 = vmatmul.bf16.gmra.mxu0 %v958
        %v2635 = vpop.f32.mrf.mxu0
        %v2636 = vadd.f32 %v2623, %v2635
        %v2637 = vpop.f32.mrf.mxu0
        %2638 = vdwg.mxu0
        %2639 = vmatpush.bf16.msra.mxu0 %v1960
        %2640 = vmatpush.bf16.msra.mxu0 %v1956
        %2641 = vmatpush.bf16.msra.mxu0 %v1952
        %2642 = vmatpush.bf16.msra.mxu0 %v1948
        %2643 = vmatpush.bf16.msra.mxu0 %v1944
        %2644 = vmatpush.bf16.msra.mxu0 %v1940
        %2645 = vmatpush.bf16.msra.mxu0 %v1936
        %2646 = vmatpush.bf16.msra.mxu0 %v1932
        %2647 = vmatmul.bf16.gmra.mxu0 %v959
        %v2648 = vpop.f32.mrf.mxu0
        %v2649 = vadd.f32 %v2636, %v2648
        %v2650 = vpop.f32.mrf.mxu0
        %2651 = vdwg.mxu0
        %2652 = vmatpush.bf16.msra.mxu0 %v1992
        %2653 = vmatpush.bf16.msra.mxu0 %v1988
        %2654 = vmatpush.bf16.msra.mxu0 %v1984
        %2655 = vmatpush.bf16.msra.mxu0 %v1980
        %2656 = vmatpush.bf16.msra.mxu0 %v1976
        %2657 = vmatpush.bf16.msra.mxu0 %v1972
        %2658 = vmatpush.bf16.msra.mxu0 %v1968
        %2659 = vmatpush.bf16.msra.mxu0 %v1964
        %2660 = vmatmul.bf16.gmra.mxu0 %v960
        %v2661 = vpop.f32.mrf.mxu0
        %v2662 = vadd.f32 %v2649, %v2661
        %v2663 = vpop.f32.mrf.mxu0
        %2664 = vdwg.mxu0
        %v2665 = vmax.f32 %v2350, 0.0
        %v2666 = vmax.f32 %v2454, 0.0
        %v2667 = vmax.f32 %v2558, 0.0
        %v2668 = vmax.f32 %v2662, 0.0
        %v2669 = vpack.c.bf16 %v2665, %v2665
        %v2670 = vpack.c.bf16 %v2666, %v2666
        %v2671 = vpack.c.bf16 %v2667, %v2667
        %v2672 = vpack.c.bf16 %v2668, %v2668
        %v2673 = vld [vmem:[#allocation3] sm:$0xff]
        %v2674 = vld [vmem:[%s407] sm:$0xf]
        %v2675 = vld [vmem:[%s407 + $0x4] sm:$0xf]
        %v2676 = vld [vmem:[%s407 + $0x8] sm:$0xf]
        %v2677 = vld [vmem:[%s407 + $0xc] sm:$0xf]
        %v2678 = vld [vmem:[%s407 + $0x10] sm:$0xf]
        %v2679 = vld [vmem:[%s407 + $0x14] sm:$0xf]
        %v2680 = vld [vmem:[%s407 + $0x18] sm:$0xf]
        %v2681 = vld [vmem:[%s407 + $0x1c] sm:$0xf]
        %v2682 = vld [vmem:[%s407 + $0x20] sm:$0xf]
        %v2683 = vld [vmem:[%s407 + $0x24] sm:$0xf]
        %v2684 = vld [vmem:[%s407 + $0x28] sm:$0xf]
        %v2685 = vld [vmem:[%s407 + $0x2c] sm:$0xf]
        %v2686 = vld [vmem:[%s407 + $0x30] sm:$0xf]
        %v2687 = vld [vmem:[%s407 + $0x34] sm:$0xf]
        %v2688 = vld [vmem:[%s407 + $0x38] sm:$0xf]
        %v2689 = vld [vmem:[%s407 + $0x3c] sm:$0xf]
        %v2690 = vld [vmem:[%s407 + $0x40] sm:$0xf]
        %v2691 = vld [vmem:[%s407 + $0x44] sm:$0xf]
        %v2692 = vld [vmem:[%s407 + $0x48] sm:$0xf]
        %v2693 = vld [vmem:[%s407 + $0x4c] sm:$0xf]
        %v2694 = vld [vmem:[%s407 + $0x50] sm:$0xf]
        %v2695 = vld [vmem:[%s407 + $0x54] sm:$0xf]
        %v2696 = vld [vmem:[%s407 + $0x58] sm:$0xf]
        %v2697 = vld [vmem:[%s407 + $0x5c] sm:$0xf]
        %v2698 = vld [vmem:[%s407 + $0x60] sm:$0xf]
        %v2699 = vld [vmem:[%s407 + $0x64] sm:$0xf]
        %v2700 = vld [vmem:[%s407 + $0x68] sm:$0xf]
        %v2701 = vld [vmem:[%s407 + $0x6c] sm:$0xf]
        %v2702 = vld [vmem:[%s407 + $0x70] sm:$0xf]
        %v2703 = vld [vmem:[%s407 + $0x74] sm:$0xf]
        %v2704 = vld [vmem:[%s407 + $0x78] sm:$0xf]
        %v2705 = vld [vmem:[%s407 + $0x7c] sm:$0xf]
        %v2706 = vld [vmem:[%s407 + $0x80] sm:$0xf]
        %v2707 = vld [vmem:[%s407 + $0x84] sm:$0xf]
        %v2708 = vld [vmem:[%s407 + $0x88] sm:$0xf]
        %v2709 = vld [vmem:[%s407 + $0x8c] sm:$0xf]
        %v2710 = vld [vmem:[%s407 + $0x90] sm:$0xf]
        %v2711 = vld [vmem:[%s407 + $0x94] sm:$0xf]
        %v2712 = vld [vmem:[%s407 + $0x98] sm:$0xf]
        %v2713 = vld [vmem:[%s407 + $0x9c] sm:$0xf]
        %v2714 = vld [vmem:[%s407 + $0xa0] sm:$0xf]
        %v2715 = vld [vmem:[%s407 + $0xa4] sm:$0xf]
        %v2716 = vld [vmem:[%s407 + $0xa8] sm:$0xf]
        %v2717 = vld [vmem:[%s407 + $0xac] sm:$0xf]
        %v2718 = vld [vmem:[%s407 + $0xb0] sm:$0xf]
        %v2719 = vld [vmem:[%s407 + $0xb4] sm:$0xf]
        %v2720 = vld [vmem:[%s407 + $0xb8] sm:$0xf]
        %v2721 = vld [vmem:[%s407 + $0xbc] sm:$0xf]
        %v2722 = vld [vmem:[%s407 + $0xc0] sm:$0xf]
        %v2723 = vld [vmem:[%s407 + $0xc4] sm:$0xf]
        %v2724 = vld [vmem:[%s407 + $0xc8] sm:$0xf]
        %v2725 = vld [vmem:[%s407 + $0xcc] sm:$0xf]
        %v2726 = vld [vmem:[%s407 + $0xd0] sm:$0xf]
        %v2727 = vld [vmem:[%s407 + $0xd4] sm:$0xf]
        %v2728 = vld [vmem:[%s407 + $0xd8] sm:$0xf]
        %v2729 = vld [vmem:[%s407 + $0xdc] sm:$0xf]
        %v2730 = vld [vmem:[%s407 + $0xe0] sm:$0xf]
        %v2731 = vld [vmem:[%s407 + $0xe4] sm:$0xf]
        %v2732 = vld [vmem:[%s407 + $0xe8] sm:$0xf]
        %v2733 = vld [vmem:[%s407 + $0xec] sm:$0xf]
        %v2734 = vld [vmem:[%s407 + $0xf0] sm:$0xf]
        %v2735 = vld [vmem:[%s407 + $0xf4] sm:$0xf]
        %v2736 = vld [vmem:[%s407 + $0xf8] sm:$0xf]
        %v2737 = vld [vmem:[%s407 + $0xfc] sm:$0xf]
        %v2802 = vunpack.c.l.b16 %v2674
        %v2803 = vunpack.c.l.b16 %v2675
        %v2804 = vunpack.c.l.b16 %v2676
        %v2805 = vunpack.c.l.b16 %v2677
        %v2806 = vunpack.c.l.b16 %v2678
        %v2807 = vunpack.c.l.b16 %v2679
        %v2808 = vunpack.c.l.b16 %v2680
        %v2809 = vunpack.c.l.b16 %v2681
        %v2810 = vunpack.c.l.b16 %v2682
        %v2811 = vunpack.c.l.b16 %v2683
        %v2812 = vunpack.c.l.b16 %v2684
        %v2813 = vunpack.c.l.b16 %v2685
        %v2814 = vunpack.c.l.b16 %v2686
        %v2815 = vunpack.c.l.b16 %v2687
        %v2816 = vunpack.c.l.b16 %v2688
        %v2817 = vunpack.c.l.b16 %v2689
        %v2818 = vunpack.c.l.b16 %v2690
        %v2819 = vunpack.c.l.b16 %v2691
        %v2820 = vunpack.c.l.b16 %v2692
        %v2821 = vunpack.c.l.b16 %v2693
        %v2822 = vunpack.c.l.b16 %v2694
        %v2823 = vunpack.c.l.b16 %v2695
        %v2824 = vunpack.c.l.b16 %v2696
        %v2825 = vunpack.c.l.b16 %v2697
        %v2826 = vunpack.c.l.b16 %v2698
        %v2827 = vunpack.c.l.b16 %v2699
        %v2828 = vunpack.c.l.b16 %v2700
        %v2829 = vunpack.c.l.b16 %v2701
        %v2830 = vunpack.c.l.b16 %v2702
        %v2831 = vunpack.c.l.b16 %v2703
        %v2832 = vunpack.c.l.b16 %v2704
        %v2833 = vunpack.c.l.b16 %v2705
        %v2834 = vunpack.c.l.b16 %v2706
        %v2835 = vunpack.c.l.b16 %v2707
        %v2836 = vunpack.c.l.b16 %v2708
        %v2837 = vunpack.c.l.b16 %v2709
        %v2838 = vunpack.c.l.b16 %v2710
        %v2839 = vunpack.c.l.b16 %v2711
        %v2840 = vunpack.c.l.b16 %v2712
        %v2841 = vunpack.c.l.b16 %v2713
        %v2842 = vunpack.c.l.b16 %v2714
        %v2843 = vunpack.c.l.b16 %v2715
        %v2844 = vunpack.c.l.b16 %v2716
        %v2845 = vunpack.c.l.b16 %v2717
        %v2846 = vunpack.c.l.b16 %v2718
        %v2847 = vunpack.c.l.b16 %v2719
        %v2848 = vunpack.c.l.b16 %v2720
        %v2849 = vunpack.c.l.b16 %v2721
        %v2850 = vunpack.c.l.b16 %v2722
        %v2851 = vunpack.c.l.b16 %v2723
        %v2852 = vunpack.c.l.b16 %v2724
        %v2853 = vunpack.c.l.b16 %v2725
        %v2854 = vunpack.c.l.b16 %v2726
        %v2855 = vunpack.c.l.b16 %v2727
        %v2856 = vunpack.c.l.b16 %v2728
        %v2857 = vunpack.c.l.b16 %v2729
        %v2858 = vunpack.c.l.b16 %v2730
        %v2859 = vunpack.c.l.b16 %v2731
        %v2860 = vunpack.c.l.b16 %v2732
        %v2861 = vunpack.c.l.b16 %v2733
        %v2862 = vunpack.c.l.b16 %v2734
        %v2863 = vunpack.c.l.b16 %v2735
        %v2864 = vunpack.c.l.b16 %v2736
        %v2865 = vunpack.c.l.b16 %v2737
        %v2866 = vpack.c.b16 %v2803, %v2802
        %v2867 = vpack.c.b16 %v2805, %v2804
        %v2868 = vpack.c.b16 %v2807, %v2806
        %v2869 = vpack.c.b16 %v2809, %v2808
        %v2870 = vpack.c.b16 %v2811, %v2810
        %v2871 = vpack.c.b16 %v2813, %v2812
        %v2872 = vpack.c.b16 %v2815, %v2814
        %v2873 = vpack.c.b16 %v2817, %v2816
        %v2874 = vpack.c.b16 %v2819, %v2818
        %v2875 = vpack.c.b16 %v2821, %v2820
        %v2876 = vpack.c.b16 %v2823, %v2822
        %v2877 = vpack.c.b16 %v2825, %v2824
        %v2878 = vpack.c.b16 %v2827, %v2826
        %v2879 = vpack.c.b16 %v2829, %v2828
        %v2880 = vpack.c.b16 %v2831, %v2830
        %v2881 = vpack.c.b16 %v2833, %v2832
        %v2882 = vpack.c.b16 %v2835, %v2834
        %v2883 = vpack.c.b16 %v2837, %v2836
        %v2884 = vpack.c.b16 %v2839, %v2838
        %v2885 = vpack.c.b16 %v2841, %v2840
        %v2886 = vpack.c.b16 %v2843, %v2842
        %v2887 = vpack.c.b16 %v2845, %v2844
        %v2888 = vpack.c.b16 %v2847, %v2846
        %v2889 = vpack.c.b16 %v2849, %v2848
        %v2890 = vpack.c.b16 %v2851, %v2850
        %v2891 = vpack.c.b16 %v2853, %v2852
        %v2892 = vpack.c.b16 %v2855, %v2854
        %v2893 = vpack.c.b16 %v2857, %v2856
        %v2894 = vpack.c.b16 %v2859, %v2858
        %v2895 = vpack.c.b16 %v2861, %v2860
        %v2896 = vpack.c.b16 %v2863, %v2862
        %v2897 = vpack.c.b16 %v2865, %v2864
        %2930 = vmatpush.bf16.msra.mxu0 %v2873
        %2931 = vmatpush.bf16.msra.mxu0 %v2872
        %2932 = vmatpush.bf16.msra.mxu0 %v2871
        %2933 = vmatpush.bf16.msra.mxu0 %v2870
        %2934 = vmatpush.bf16.msra.mxu0 %v2869
        %2935 = vmatpush.bf16.msra.mxu0 %v2868
        %2936 = vmatpush.bf16.msra.mxu0 %v2867
        %2937 = vmatpush.bf16.msra.mxu0 %v2866
        %2938 = vmatmul.bf16.gmra.mxu0 %v2669
        %v2939 = vpop.f32.mrf.mxu0
        %v2940 = vadd.f32 0.0, %v2939
        %v2941 = vpop.f32.mrf.mxu0
        %2942 = vdwg.mxu0
        %2943 = vmatpush.bf16.msra.mxu0 %v2881
        %2944 = vmatpush.bf16.msra.mxu0 %v2880
        %2945 = vmatpush.bf16.msra.mxu0 %v2879
        %2946 = vmatpush.bf16.msra.mxu0 %v2878
        %2947 = vmatpush.bf16.msra.mxu0 %v2877
        %2948 = vmatpush.bf16.msra.mxu0 %v2876
        %2949 = vmatpush.bf16.msra.mxu0 %v2875
        %2950 = vmatpush.bf16.msra.mxu0 %v2874
        %2951 = vmatmul.bf16.gmra.mxu0 %v2670
        %v2952 = vpop.f32.mrf.mxu0
        %v2953 = vadd.f32 %v2940, %v2952
        %v2954 = vpop.f32.mrf.mxu0
        %2955 = vdwg.mxu0
        %2956 = vmatpush.bf16.msra.mxu0 %v2889
        %2957 = vmatpush.bf16.msra.mxu0 %v2888
        %2958 = vmatpush.bf16.msra.mxu0 %v2887
        %2959 = vmatpush.bf16.msra.mxu0 %v2886
        %2960 = vmatpush.bf16.msra.mxu0 %v2885
        %2961 = vmatpush.bf16.msra.mxu0 %v2884
        %2962 = vmatpush.bf16.msra.mxu0 %v2883
        %2963 = vmatpush.bf16.msra.mxu0 %v2882
        %2964 = vmatmul.bf16.gmra.mxu0 %v2671
        %v2965 = vpop.f32.mrf.mxu0
        %v2966 = vadd.f32 %v2953, %v2965
        %v2967 = vpop.f32.mrf.mxu0
        %2968 = vdwg.mxu0
        %2969 = vmatpush.bf16.msra.mxu0 %v2897
        %2970 = vmatpush.bf16.msra.mxu0 %v2896
        %2971 = vmatpush.bf16.msra.mxu0 %v2895
        %2972 = vmatpush.bf16.msra.mxu0 %v2894
        %2973 = vmatpush.bf16.msra.mxu0 %v2893
        %2974 = vmatpush.bf16.msra.mxu0 %v2892
        %2975 = vmatpush.bf16.msra.mxu0 %v2891
        %2976 = vmatpush.bf16.msra.mxu0 %v2890
        %2977 = vmatmul.bf16.gmra.mxu0 %v2672
        %v2978 = vpop.f32.mrf.mxu0
        %v2979 = vadd.f32 %v2966, %v2978
        %v2980 = vpop.f32.mrf.mxu0
        %2981 = vdwg.mxu0
        %v2982 = vadd.f32 %v2673, %v2979
        %2983 = vst [vmem:[#allocation3] sm:$0xff] %v2982
        %p2984 = scmp.eq.s32.totalorder %s32, 3
        // Predicated region
        $region81: #{tpu_custom_call.1} parent=47 // pred_check
          %p2985 = pneg %p2984
        $region82: #{tpu_custom_call.1} parent=47 // pred_check_branch
          %2987 = sbr.rel (%p2985) target = $region84
        $region83: #{tpu_custom_call.1} parent=47 // pred_region
          %v2988 = vld [vmem:[#allocation3] sm:$0xff]
          %2989 = vst [vmem:[#allocation16] sm:$0xff] %v2988
        $region84: #{tpu_custom_call.1} parent=47 // pred_fallthru
          _
        // Predicated region
        $region85: #{tpu_custom_call.1} parent=47 // pred_check
          %p2990 = pneg %p224
        $region86: #{tpu_custom_call.1} parent=47 // pred_check_branch
          %2992 = sbr.rel (%p2990) target = $region88
        $region87: #{tpu_custom_call.1} parent=47 // pred_region
          %2994 = vsyncadd [#allocation6], 0
          %s2995 = smul.addr %s31, 8
          %s2996 = scalar_lea.hbm %s7, %s2995
          %s2998 = sshll.u32 [#allocation16], 4
          %s2999 = int_to_ptr.vmem [resolvable:$true] %s2998
          %s3000 = sshll.u32 %s2996, 4
          %s3001 = int_to_ptr.hbm [resolvable:$true] %s3000
          %3003 = dma.vmem_to_hbm [thread:$0]  %s2999, 128, %s3001, [#allocation6]
        $region88: #{tpu_custom_call.1} parent=47 // pred_fallthru
          _
        // Predicated region
        $region89: #{tpu_custom_call.1} parent=47 // pred_check
          %p3004 = pneg %p224
        $region90: #{tpu_custom_call.1} parent=47 // pred_check_branch
          %3006 = sbr.rel (%p3004) target = $region92
        $region91: #{tpu_custom_call.1} parent=47 // pred_region
          %3008 = dma.done [#allocation6], 128
        $region92: #{tpu_custom_call.1} parent=47 // pred_fallthru
          _
      $region48: #{tpu_custom_call.1} parent=5 // pred_fallthru
        _
      %p3009 = scmp.le.s32.totalorder 2, %s22
      // Predicated region
      $region93: #{tpu_custom_call.1} parent=5 // pred_check
        %p3010 = pneg %p3009
      $region94: #{tpu_custom_call.1} parent=5 // pred_check_branch
        %3012 = sbr.rel (%p3010) target = $region96
      $region95: #{tpu_custom_call.1} parent=5 // pred_region
        %s3013 = ssub.s32 %s22, 2
      $region96: #{tpu_custom_call.1} parent=5 // pred_fallthru
        _
    $region6: #{tpu_custom_call.1} parent=1 // loop_footer
      %s26 = sadd.s32 1, %s22
    $region7: #{tpu_custom_call.1} parent=1 // loop_footer_branch
      %21 = sbr.rel target = $region3
    $region8: #{tpu_custom_call.1} parent=1 // loop_exit
      _
    %3014 = vsyncpa [#allocation5], 1
    %s3015 = scalar_lea.sflag [#allocation5], 1
    %3016 = vsyncpa %s3015, 1
    %3017 = vsyncpa [#allocation8], 1
    %3018 = vsyncpa [#allocation11], 1
    %s3019 = scalar_lea.sflag [#allocation11], 1
    %3020 = vsyncpa %s3019, 1
    %3021 = vsyncpa [#allocation14], 1
    %s3022 = scalar_lea.sflag [#allocation14], 1
    %3023 = vsyncpa %s3022, 1
    %3024 = vsyncpa [#allocation6], 1
    %s3025 = scalar_lea.sflag [#allocation6], 1
    %3026 = vsyncpa %s3025, 1

</llo_original>
